<compile_context>
chip_gen: v7x
topology: tpu7x:2x2x1
jax: 0.10.0
libtpu: 0.0.40
codegen_flags: <defaults>
</compile_context>

<pallas_src>
import functools
import math

import jax
import jax.numpy as jnp
from jax.experimental import pallas as pl
from jax.experimental.pallas import tpu as pltpu

# VGG16 "D" configuration with batch norm (utils.OCR_VGG_cfg).
OCR_VGG_CFG = [64, 64, 'M', 128, 128, 'M', 256, 256, 256, 'M',
               512, 512, 512, 'M', 512, 512, 512, 'M']

BN_EPS = 1e-5

_VMEM_LIMIT = None


def _vmem_limit_bytes():
    """Generation-aware scoped-VMEM limit (~75% of physical, capped at 100 MiB)."""
    global _VMEM_LIMIT
    if _VMEM_LIMIT is None:
        try:
            cap = int(pltpu.get_tpu_info().vmem_capacity_bytes)
        except Exception:
            cap = 64 * 1024 * 1024            # conservative (v7x-sized) fallback
        _VMEM_LIMIT = min((cap * 3) // 4, 100 * 1024 * 1024)
    return _VMEM_LIMIT


# ---------------------------------------------------------------------------
# Pallas kernels
# ---------------------------------------------------------------------------
def _mm_bn_relu_kernel(p_ref, w_ref, s_ref, b_ref, o_ref):
    """First conv (Cin=3): one big-K matmul + affine BN + ReLU.

    p_ref: (1, TM, K)    bf16 tap-major im2col rows (K padded 27 -> 32)
    w_ref: (K, Cout)     bf16
    s_ref/b_ref: (1, Cout) f32 fused BN scale / shift
    o_ref: (1, TM, Cout) bf16
    """
    acc = jnp.dot(p_ref[0], w_ref[...], preferred_element_type=jnp.float32)
    y = jnp.maximum(acc * s_ref[...] + b_ref[...], 0.0)
    o_ref[0] = y.astype(o_ref.dtype)


def _conv3x3_bn_relu_kernel(xm_ref, xh_ref, w_ref, s_ref, b_ref, o_ref,
                            col_ref, *, pool):
    """3x3 conv + BN + ReLU (optional fused 2x2 max-pool) over one row tile.

    xm_ref: (1, TH, W+2, Cin)    bf16  rows [t*TH, (t+1)*TH) of padded x
    xh_ref: (1, 1, 2, W+2, Cin)  bf16  the 2 extra halo rows of this tile
    w_ref : (9*Cin, TCo)         bf16  (dy, dx, cin)-major weights
    s_ref/b_ref: (1, TCo)        f32   fused BN scale / shift
    o_ref : (1, R, TCo)          bf16  R = TH*W (or TH/2 * W/2 when pooled)
    col_ref: (TH*W, 9*Cin)       bf16  VMEM im2col scratch
    """
    th = xm_ref.shape[1]
    wd = xm_ref.shape[2] - 2
    cin = xm_ref.shape[3]
    tc = o_ref.shape[2]

    # In-kernel im2col: every tap is repacked exactly once into the scratch.
    for dy in range(3):
        top = max(th - dy, 0)            # rows sourced from the main block
        bot = min(dy, th)                # rows sourced from the 2-row halo
        for dx in range(3):
            c0 = (dy * 3 + dx) * cin
            if top:
                col_ref[0:top * wd, c0:c0 + cin] = (
                    xm_ref[0, dy:dy + top, dx:dx + wd, :]
                    .reshape(top * wd, cin))
            if bot:
                b0 = dy - bot
                col_ref[top * wd:th * wd, c0:c0 + cin] = (
                    xh_ref[0, 0, b0:b0 + bot, dx:dx + wd, :]
                    .reshape(bot * wd, cin))

    # Single big-K MXU matmul; BN + ReLU fused in f32.
    acc = jnp.dot(col_ref[...], w_ref[...], preferred_element_type=jnp.float32)
    y = jnp.maximum(acc * s_ref[...] + b_ref[...], 0.0)

    if pool:
        # Fused 2x2 / stride-2 max-pool: fold the column pair into lanes.
        y = y.reshape(th // 2, 2, wd // 2, 2 * tc)
        v = jnp.maximum(y[:, 0], y[:, 1])                 # vertical max
        y = jnp.maximum(v[:, :, :tc], v[:, :, tc:])       # horizontal max
        y = y.reshape((th // 2) * (wd // 2), tc)

    o_ref[0] = y.astype(o_ref.dtype)


# ---------------------------------------------------------------------------
# Tile selection (VMEM-budget aware)
# ---------------------------------------------------------------------------
def _conv1_tile(hw, kdim, cout, budget):
    def need(tm):
        return (2 * tm * kdim * 2 + 2 * kdim * cout * 2
                + 2 * tm * cout * 2 + tm * cout * 4)
    t, cands = hw, []
    while True:
        if t == hw or t % 8 == 0:
            cands.append(t)
        if t % 2 or t <= 8:
            break
        t //= 2
    for t in cands:
        if need(t) <= budget:
            return t
    return cands[-1]


def _conv_row_tile(h, wd, cin, cout, pool, budget):
    def need(th):
        rows = (th // 2) * (wd // 2) if pool else th * wd
        return (2 * th * (wd + 2) * cin * 2       # main x block (double-buffered)
                + 2 * 2 * (wd + 2) * cin * 2      # halo rows
                + 2 * 9 * cin * cout * 2          # weights
                + 2 * rows * cout * 2             # output block
                + th * wd * 9 * cin * 2           # im2col scratch
                + th * wd * cout * 4              # f32 matmul result
                + 4 * cout * 4 * 2)               # BN scale / shift
    t, cands = h, []
    while True:
        ok = (not pool) or (t % 2 == 0)
        if t != h:
            rows = (t // 2) * (wd // 2) if pool else t * wd
            ok = ok and (rows % 8 == 0)
        if ok:
            cands.append(t)
        if t % 2 or t <= 2:
            break
        t //= 2
    if not cands:
        return h
    for t in cands:
        if need(t) <= budget:
            return t
    return cands[-1]


# ---------------------------------------------------------------------------
# Wrappers
# ---------------------------------------------------------------------------
def _conv_first_bn_relu(x_nhwc, w, scale, shift):
    """First conv (Cin<=4): wrapper-built tap-major patches, one K=32 matmul."""
    n, h, wd, cin = x_nhwc.shape
    cout = w.shape[-1]
    hw = h * wd
    k = 9 * cin
    kp = -k % 8                                    # pad K: 27 -> 32

    xb = x_nhwc.astype(jnp.bfloat16)
    xp = jnp.pad(xb, ((0, 0), (1, 1), (1, 1), (0, 0)))
    patches = jnp.concatenate(
        [xp[:, dy:dy + h, dx:dx + wd, :] for dy in range(3) for dx in range(3)],
        axis=-1)                                   # (N, H, W, 27) -- cheap, Cin=3
    if kp:
        patches = jnp.pad(patches, ((0, 0), (0, 0), (0, 0), (0, kp)))
    patches = patches.reshape(n, hw, k + kp)

    wk = w.reshape(k, cout)
    if kp:
        wk = jnp.pad(wk, ((0, kp), (0, 0)))
    wk = wk.astype(jnp.bfloat16)
    s2 = scale.reshape(1, cout).astype(jnp.float32)
    b2 = shift.reshape(1, cout).astype(jnp.float32)

    vmem_limit = _vmem_limit_bytes()
    tm = _conv1_tile(hw, k + kp, cout, vmem_limit // 2)
    out = pl.pallas_call(
        _mm_bn_relu_kernel,
        out_shape=jax.ShapeDtypeStruct((n, hw, cout), jnp.bfloat16),
        grid=(n, hw // tm),
        in_specs=[
            pl.BlockSpec((1, tm, k + kp), lambda i, t: (i, t, 0)),
            pl.BlockSpec((k + kp, cout), lambda i, t: (0, 0)),
            pl.BlockSpec((1, cout), lambda i, t: (0, 0)),
            pl.BlockSpec((1, cout), lambda i, t: (0, 0)),
        ],
        out_specs=pl.BlockSpec((1, tm, cout), lambda i, t: (i, t, 0)),
        compiler_params=pltpu.CompilerParams(
            dimension_semantics=("parallel", "parallel"),
            vmem_limit_bytes=vmem_limit),
    )(patches, wk, s2, b2)
    return out.reshape(n, h, wd, cout)


def conv3x3_bn_relu(x_nhwc, w, scale, shift, pool=False):
    """3x3 conv (pad 1) + BN(eval) + ReLU, optionally fused with 2x2 max-pool.

    x_nhwc: (N, H, W, Cin); w: (3, 3, Cin, Cout); scale/shift: (Cout,).
    Returns bf16 NHWC activations (spatially halved when pool=True).
    """
    n, h, wd, cin = x_nhwc.shape
    cout = w.shape[-1]
    if cin <= 4:
        # First conv of the trunk; never followed by a pool in this cfg.
        assert not pool
        return _conv_first_bn_relu(x_nhwc, w, scale, shift)

    vmem_limit = _vmem_limit_bytes()
    th = _conv_row_tile(h, wd, cin, cout, pool, vmem_limit // 2)
    nt = h // th

    xb = x_nhwc if x_nhwc.dtype == jnp.bfloat16 else x_nhwc.astype(jnp.bfloat16)
    xp = jnp.pad(xb, ((0, 0), (1, 1), (1, 1), (0, 0)))    # (N, H+2, W+2, Cin)
    # Tiny 2-row halo side input (2 rows per tile, ~2/TH of the activation;
    # the full overlapping-tile stack of v1 is gone).
    xh = jnp.stack([xp[:, t * th + th: t * th + th + 2] for t in range(nt)],
                   axis=1)                                 # (N, NT, 2, W+2, Cin)

    # Keep Cout whole so the (9*Cin, Cout) weight slab is DMA'd once and stays
    # resident; split only when the grid would otherwise have <2 parallel
    # steps so both v7x TensorCores get work.
    nc = 2 if (n * nt == 1 and cout >= 256) else 1
    tc = cout // nc

    w2 = w.reshape(9 * cin, cout).astype(jnp.bfloat16)
    s2 = scale.reshape(1, cout).astype(jnp.float32)
    b2 = shift.reshape(1, cout).astype(jnp.float32)

    if pool:
        ho, wo = h // 2, wd // 2
        rows_tile, rows_all = (th // 2) * wo, ho * wo
    else:
        ho, wo = h, wd
        rows_tile, rows_all = th * wd, h * wd

    kernel = functools.partial(_conv3x3_bn_relu_kernel, pool=pool)
    out = pl.pallas_call(
        kernel,
        out_shape=jax.ShapeDtypeStruct((n, rows_all, cout), jnp.bfloat16),
        grid=(n, nc, nt),
        in_specs=[
            pl.BlockSpec((1, th, wd + 2, cin), lambda i, c, t: (i, t, 0, 0)),
            pl.BlockSpec((1, 1, 2, wd + 2, cin),
                         lambda i, c, t: (i, t, 0, 0, 0)),
            pl.BlockSpec((9 * cin, tc), lambda i, c, t: (0, c)),
            pl.BlockSpec((1, tc), lambda i, c, t: (0, c)),
            pl.BlockSpec((1, tc), lambda i, c, t: (0, c)),
        ],
        out_specs=pl.BlockSpec((1, rows_tile, tc), lambda i, c, t: (i, t, c)),
        scratch_shapes=[pltpu.VMEM((th * wd, 9 * cin), jnp.bfloat16)],
        compiler_params=pltpu.CompilerParams(
            dimension_semantics=("parallel", "parallel", "parallel"),
            vmem_limit_bytes=vmem_limit),
    )(xp, xh, w2, s2, b2)
    return out.reshape(n, ho, wo, cout)


# ---------------------------------------------------------------------------
# Parameter init (deterministic, mirrors the PyTorch __init__)
# ---------------------------------------------------------------------------
def init_params(key, cfg):
    params = []
    cin = 3
    for idx, v in enumerate(cfg):
        if v == 'M':
            continue
        pool_after = idx + 1 < len(cfg) and cfg[idx + 1] == 'M'
        key, kw = jax.random.split(key)
        # kaiming_normal_(mode='fan_out', nonlinearity='relu'):
        fan_out = v * 3 * 3
        std = math.sqrt(2.0 / fan_out)
        w = std * jax.random.normal(kw, (3, 3, cin, v), jnp.float32)
        # Conv bias init = 0; BN init: gamma=1, beta=0, running mean/var = 0/1.
        gamma = jnp.ones((v,), jnp.float32)
        beta = jnp.zeros((v,), jnp.float32)
        mean = jnp.zeros((v,), jnp.float32)
        var = jnp.ones((v,), jnp.float32)
        scale = gamma / jnp.sqrt(var + BN_EPS)
        shift = beta - mean * scale            # conv bias (=0) folded in here
        params.append((w, scale, shift, pool_after))
        cin = v
    return params


def extractor_forward(x_nchw, params):
    """VGG16-BN feature trunk; returns feature maps after pools 2..5 (NCHW)."""
    x = jnp.transpose(x_nchw, (0, 2, 3, 1))              # -> NHWC
    pooled = []
    for w, scale, shift, pool_after in params:
        x = conv3x3_bn_relu(x, w, scale, shift, pool=pool_after)
        if pool_after:
            pooled.append(x)
    # PyTorch forward returns out[1:] (feature maps after pools 2,3,4,5), NCHW.
    return [jnp.transpose(o, (0, 3, 1, 2)).astype(jnp.float32)
            for o in pooled[1:]]


if __name__ == "__main__":
    key = jax.random.PRNGKey(0)
    k_params, kx = jax.random.split(key)
    params = init_params(k_params, OCR_VGG_CFG)

    # Small input consistent with the module: NCHW image batch, 3 channels,
    # spatial 32 (divisible by 2^5 for the five max-pools).
    x = jax.random.normal(kx, (2, 3, 32, 32), jnp.float32)

    outs = extractor_forward(x, params)
    outs = jax.block_until_ready(outs)

    # Expected shapes: (2,128,8,8), (2,256,4,4), (2,512,2,2), (2,512,1,1)
    expected = [(2, 128, 8, 8), (2, 256, 4, 4), (2, 512, 2, 2), (2, 512, 1, 1)]
    assert [tuple(o.shape) for o in outs] == expected
    print("KERNEL_OK")
</pallas_src>

<mosaic_0001>
module attributes {stable_mosaic.version = 11 : i64} {
  func.func @_mm_bn_relu_kernel(%arg0: i32, %arg1: i32, %arg2: memref<1x1024x32xbf16, #tpu.memory_space<vmem>>, %arg3: memref<32x64xbf16, #tpu.memory_space<vmem>>, %arg4: memref<1x64xf32, #tpu.memory_space<vmem>>, %arg5: memref<1x64xf32, #tpu.memory_space<vmem>>, %arg6: memref<1x1024x64xbf16, #tpu.memory_space<vmem>>) attributes {dimension_semantics = [#tpu.dimension_semantics<parallel>, #tpu.dimension_semantics<parallel>], iteration_bounds = array<i64: 2, 1>, scalar_prefetch = 0 : i64, scratch_operands = 0 : i64, tpu.core_type = #tpu.core_type<tc>, window_params = [{transform_indices = @transform_0, window_bounds = array<i64: 1, 1024, 32>}, {pipeline_mode = #tpu.pipeline_mode<synchronous>, transform_indices = @transform_1, window_bounds = array<i64: 32, 64>}, {pipeline_mode = #tpu.pipeline_mode<synchronous>, transform_indices = @transform_2, window_bounds = array<i64: 1, 64>}, {pipeline_mode = #tpu.pipeline_mode<synchronous>, transform_indices = @transform_3, window_bounds = array<i64: 1, 64>}, {transform_indices = @transform_4, window_bounds = array<i64: 1, 1024, 64>}]} {
    %c0 = arith.constant 0 : index
    %c0_0 = arith.constant 0 : index
    %c0_1 = arith.constant 0 : index
    %0 = vector.load %arg2[%c0, %c0_0, %c0_1] : memref<1x1024x32xbf16, #tpu.memory_space<vmem>>, vector<1x1024x32xbf16>
    %1 = vector.shape_cast %0 : vector<1x1024x32xbf16> to vector<1024x32xbf16>
    %c0_2 = arith.constant 0 : index
    %c0_3 = arith.constant 0 : index
    %2 = vector.load %arg3[%c0_2, %c0_3] : memref<32x64xbf16, #tpu.memory_space<vmem>>, vector<32x64xbf16>
    %cst = arith.constant dense<0.000000e+00> : vector<1024x64xf32>
    %3 = tpu.matmul %1, %2, %cst {dimension_numbers = #tpu.dot_dimension_numbers<[1], [0], [0], [1], [0, 0, 1, 1], [], []>} : vector<1024x32xbf16>, vector<32x64xbf16>, vector<1024x64xf32> -> vector<1024x64xf32>
    %c0_4 = arith.constant 0 : index
    %c0_5 = arith.constant 0 : index
    %4 = vector.load %arg4[%c0_4, %c0_5] : memref<1x64xf32, #tpu.memory_space<vmem>>, vector<1x64xf32>
    %5 = vector.broadcast %4 : vector<1x64xf32> to vector<1024x64xf32>
    %6 = arith.mulf %3, %5 : vector<1024x64xf32>
    %c0_6 = arith.constant 0 : index
    %c0_7 = arith.constant 0 : index
    %7 = vector.load %arg5[%c0_6, %c0_7] : memref<1x64xf32, #tpu.memory_space<vmem>>, vector<1x64xf32>
    %8 = vector.broadcast %7 : vector<1x64xf32> to vector<1024x64xf32>
    %9 = arith.addf %6, %8 : vector<1024x64xf32>
    %cst_8 = arith.constant 0.000000e+00 : f32
    %10 = vector.broadcast %cst_8 : f32 to vector<1024x64xf32>
    %11 = arith.maximumf %9, %10 : vector<1024x64xf32>
    %12 = arith.truncf %11 : vector<1024x64xf32> to vector<1024x64xbf16>
    %c0_9 = arith.constant 0 : index
    %c0_10 = arith.constant 0 : index
    %c0_11 = arith.constant 0 : index
    %13 = vector.load %arg6[%c0_9, %c0_10, %c0_11] : memref<1x1024x64xbf16, #tpu.memory_space<vmem>>, vector<1x1024x64xbf16>
    %14 = vector.shape_cast %13 : vector<1x1024x64xbf16> to vector<1024x64xbf16>
    %15 = vector.shape_cast %12 : vector<1024x64xbf16> to vector<1x1024x64xbf16>
    tpu.vector_store %arg6[%c0_9, %c0_10, %c0_11], %15 {strides = array<i32>} : memref<1x1024x64xbf16, #tpu.memory_space<vmem>>, vector<1x1024x64xbf16>,
    return
  }
  func.func @transform_0(%arg0: i32, %arg1: i32) -> (i32, i32, i32) {
    %c0_i32 = arith.constant 0 : i32
    %c0_i32_0 = arith.constant 0 : i32
    return %arg0, %arg1, %c0_i32 : i32, i32, i32
  }
  func.func @transform_1(%arg0: i32, %arg1: i32) -> (i32, i32) {
    %c0_i32 = arith.constant 0 : i32
    %c0_i32_0 = arith.constant 0 : i32
    %c0_i32_1 = arith.constant 0 : i32
    return %c0_i32, %c0_i32_0 : i32, i32
  }
  func.func @transform_2(%arg0: i32, %arg1: i32) -> (i32, i32) {
    %c0_i32 = arith.constant 0 : i32
    %c0_i32_0 = arith.constant 0 : i32
    %c0_i32_1 = arith.constant 0 : i32
    return %c0_i32, %c0_i32_0 : i32, i32
  }
  func.func @transform_3(%arg0: i32, %arg1: i32) -> (i32, i32) {
    %c0_i32 = arith.constant 0 : i32
    %c0_i32_0 = arith.constant 0 : i32
    %c0_i32_1 = arith.constant 0 : i32
    return %c0_i32, %c0_i32_0 : i32, i32
  }
  func.func @transform_4(%arg0: i32, %arg1: i32) -> (i32, i32, i32) {
    %c0_i32 = arith.constant 0 : i32
    %c0_i32_0 = arith.constant 0 : i32
    return %arg0, %arg1, %c0_i32 : i32, i32, i32
  }
}

</mosaic_0001>

<llo_original>
// kernel: tpu_custom_call.1
$region0: #{tpu_custom_call.1}
  #allocation0 [shape = 'u32[]', space=smem, size = 0x4, offset = 0x4, fixed_abs, tag = 'smem constant byte address 0x4 - core index']
  #allocation1 [shape = 'u32[144,128]{1,0:T(1,128)}', space=vmem, size = 0x12000, scoped, tag = 'internal scratch']
  %s0 = inlined_call_operand.vmem [shape: bf16[2,1024,32], index: 0, kind: input, shape index: {}]
  %s1 = inlined_call_operand.vmem [shape: bf16[32,64], index: 1, kind: input, shape index: {}]
  %s2 = inlined_call_operand.vmem [shape: f32[1,64], index: 2, kind: input, shape index: {}]
  %s3 = inlined_call_operand.vmem [shape: f32[1,64], index: 3, kind: input, shape index: {}]
  %s4 = inlined_call_operand.vmem [shape: bf16[2,1024,64], index: 4, kind: output, shape index: {}]
  %s5 = sld [smem:[#allocation0]]
  $region49: #{tpu_custom_call.1} parent=0
    _
  %s7 = ssub.s32 1, %s5
  %s8 = scalar_select 0, %s7, %s5
  loop: start=0, step=1, limit=4
  $region2: #{tpu_custom_call.1} parent=0 // loop_pre_header
    _
  $region3: #{tpu_custom_call.1} parent=0 // loop_header
    %s10 = sphi 0, %s14
    %p11 = scmp.ge.s32.totalorder %s10, 4
    %s17 = sphi 0, %s29
    %s18 = sphi 0, %s25
    %s19 = sphi 0, %s17
    %s20 = sphi 0, %s18
    %s21 = sphi 0, %s19
    %s22 = sphi 0, %s20
    %s34 = sphi 0, %s36
    %s37 = sphi 0, %s34
    %s38 = sphi 0, %s37
    %s54 = sphi 0, %s38
    %s58 = sphi 0, %s58
    %s60 = sphi 0, %s58
    %s61 = sphi 0, %s60
    %s75 = sphi 0, %s61
    %s79 = sphi 0, %s79
    %s81 = sphi 0, %s79
    %s82 = sphi 0, %s81
    %s96 = sphi 0, %s82
    %s100 = sphi 0, %s100
    %s102 = sphi 0, %s100
    %s103 = sphi 0, %s102
    %s117 = sphi 0, %s103
    %s125 = sphi 0, %s127
    %s128 = sphi 0, %s125
    %s129 = sphi 0, %s128
    %s145 = sphi 0, %s129
  $region4: #{tpu_custom_call.1} parent=0 // loop_header_branch
    %13 = sbr.rel (%p11) target = $region8
  $region5: #{tpu_custom_call.1} parent=0 // loop_body
    %s15 = ssub.s32 %s10, 1
    %s16 = ssub.s32 %s10, 2
    %s23 = sadd.s32 1, %s18
    %p24 = scmp.ge.s32.totalorder %s23, 1
    %s25 = scalar_select %p24, 0, %s23
    %s26 = sadd.s32 1, %s17
    %s27 = scalar_select %p24, %s26, %s17
    %p28 = scmp.ge.s32.totalorder %s27, 2
    %s29 = scalar_select %p28, 0, %s27
    %s30 = ssub.s32 %s17, %s29
    %s31 = ssub.s32 %s18, %s25
    %s32 = sor.u32 %s30, %s31
    %p33 = scmp.eq.s32.totalorder %s32, 0
    %s35 = sadd.s32 %s34, 1
    %s36 = scalar_select %p33, %s34, %s35
    %p39 = pneg %p33
    %p40 = scmp.eq.s32.totalorder %s10, 1
    %p41 = por %p39, %p40
    %p42 = scmp.ne.s32.totalorder %s34, %s37
    %p43 = scmp.eq.s32.totalorder %s10, 0
    %p44 = por %p42, %p43
    %p45 = scmp.ne.s32.totalorder %s34, %s37
    %p46 = scmp.eq.s32.totalorder %s15, 1
    %p47 = por %p45, %p46
    %p48 = scmp.ne.s32.totalorder %s37, %s38
    %p49 = scmp.eq.s32.totalorder %s15, 0
    %p50 = por %p48, %p49
    %p51 = scmp.ne.s32.totalorder %s37, %s38
    %p52 = scmp.eq.s32.totalorder %s16, 1
    %p53 = por %p51, %p52
    %p55 = scmp.ne.s32.totalorder %s38, %s54
    %p56 = scmp.eq.s32.totalorder %s16, 0
    %p57 = por %p55, %p56
    %s59 = sadd.s32 %s58, 1
    %p62 = scmp.eq.s32.totalorder %s10, 1
    %p63 = scmp.ne.s32.totalorder %s58, %s60
    %p64 = scmp.eq.s32.totalorder %s10, 0
    %p65 = por %p63, %p64
    %p66 = scmp.ne.s32.totalorder %s58, %s60
    %p67 = scmp.eq.s32.totalorder %s15, 1
    %p68 = por %p66, %p67
    %p69 = scmp.ne.s32.totalorder %s60, %s61
    %p70 = scmp.eq.s32.totalorder %s15, 0
    %p71 = por %p69, %p70
    %p72 = scmp.ne.s32.totalorder %s60, %s61
    %p73 = scmp.eq.s32.totalorder %s16, 1
    %p74 = por %p72, %p73
    %p76 = scmp.ne.s32.totalorder %s61, %s75
    %p77 = scmp.eq.s32.totalorder %s16, 0
    %p78 = por %p76, %p77
    %s80 = sadd.s32 %s79, 1
    %p83 = scmp.eq.s32.totalorder %s10, 1
    %p84 = scmp.ne.s32.totalorder %s79, %s81
    %p85 = scmp.eq.s32.totalorder %s10, 0
    %p86 = por %p84, %p85
    %p87 = scmp.ne.s32.totalorder %s79, %s81
    %p88 = scmp.eq.s32.totalorder %s15, 1
    %p89 = por %p87, %p88
    %p90 = scmp.ne.s32.totalorder %s81, %s82
    %p91 = scmp.eq.s32.totalorder %s15, 0
    %p92 = por %p90, %p91
    %p93 = scmp.ne.s32.totalorder %s81, %s82
    %p94 = scmp.eq.s32.totalorder %s16, 1
    %p95 = por %p93, %p94
    %p97 = scmp.ne.s32.totalorder %s82, %s96
    %p98 = scmp.eq.s32.totalorder %s16, 0
    %p99 = por %p97, %p98
    %s101 = sadd.s32 %s100, 1
    %p104 = scmp.eq.s32.totalorder %s10, 1
    %p105 = scmp.ne.s32.totalorder %s100, %s102
    %p106 = scmp.eq.s32.totalorder %s10, 0
    %p107 = por %p105, %p106
    %p108 = scmp.ne.s32.totalorder %s100, %s102
    %p109 = scmp.eq.s32.totalorder %s15, 1
    %p110 = por %p108, %p109
    %p111 = scmp.ne.s32.totalorder %s102, %s103
    %p112 = scmp.eq.s32.totalorder %s15, 0
    %p113 = por %p111, %p112
    %p114 = scmp.ne.s32.totalorder %s102, %s103
    %p115 = scmp.eq.s32.totalorder %s16, 1
    %p116 = por %p114, %p115
    %p118 = scmp.ne.s32.totalorder %s103, %s117
    %p119 = scmp.eq.s32.totalorder %s16, 0
    %p120 = por %p118, %p119
    %s121 = ssub.s32 %s17, %s29
    %s122 = ssub.s32 %s18, %s25
    %s123 = sor.u32 %s121, %s122
    %p124 = scmp.eq.s32.totalorder %s123, 0
    %s126 = sadd.s32 %s125, 1
    %s127 = scalar_select %p124, %s125, %s126
    %p130 = pneg %p124
    %p131 = scmp.eq.s32.totalorder %s10, 1
    %p132 = por %p130, %p131
    %p133 = scmp.ne.s32.totalorder %s125, %s128
    %p134 = scmp.eq.s32.totalorder %s10, 0
    %p135 = por %p133, %p134
    %p136 = scmp.ne.s32.totalorder %s125, %s128
    %p137 = scmp.eq.s32.totalorder %s15, 1
    %p138 = por %p136, %p137
    %p139 = scmp.ne.s32.totalorder %s128, %s129
    %p140 = scmp.eq.s32.totalorder %s15, 0
    %p141 = por %p139, %p140
    %p142 = scmp.ne.s32.totalorder %s128, %s129
    %p143 = scmp.eq.s32.totalorder %s16, 1
    %p144 = por %p142, %p143
    %p146 = scmp.ne.s32.totalorder %s129, %s145
    %p147 = scmp.eq.s32.totalorder %s16, 0
    %p148 = por %p146, %p147
    %p149 = scmp.le.s32.totalorder 1, %s10
    %p150 = scmp.lt.s32.totalorder %s10, 3
    %p151 = pnand %p149, %p150
    %p152 = pneg %p151
    // Predicated region
    $region9: #{tpu_custom_call.1} parent=5 // pred_check
      _
    $region10: #{tpu_custom_call.1} parent=5 // pred_check_branch
      %154 = sbr.rel (%p151) target = $region12
    $region11: #{tpu_custom_call.1} parent=5 // pred_region
      %s155 = ssub.s32 %s10, 1
      // Predicated region
      $region13: #{tpu_custom_call.1} parent=11 // pred_check
        %p156 = pneg %p71
      $region14: #{tpu_custom_call.1} parent=11 // pred_check_branch
        %158 = sbr.rel (%p156) target = $region16
      $region15: #{tpu_custom_call.1} parent=11 // pred_region
        _
      $region16: #{tpu_custom_call.1} parent=11 // pred_fallthru
        _
      // Predicated region
      $region17: #{tpu_custom_call.1} parent=11 // pred_check
        %p159 = pneg %p92
      $region18: #{tpu_custom_call.1} parent=11 // pred_check_branch
        %161 = sbr.rel (%p159) target = $region20
      $region19: #{tpu_custom_call.1} parent=11 // pred_region
        _
      $region20: #{tpu_custom_call.1} parent=11 // pred_fallthru
        _
      // Predicated region
      $region21: #{tpu_custom_call.1} parent=11 // pred_check
        %p162 = pneg %p113
      $region22: #{tpu_custom_call.1} parent=11 // pred_check_branch
        %164 = sbr.rel (%p162) target = $region24
      $region23: #{tpu_custom_call.1} parent=11 // pred_region
        _
      $region24: #{tpu_custom_call.1} parent=11 // pred_fallthru
        _
    $region12: #{tpu_custom_call.1} parent=5 // pred_fallthru
      _
    %p165 = scmp.lt.s32.totalorder %s10, 2
    // Predicated region
    $region25: #{tpu_custom_call.1} parent=5 // pred_check
      %p166 = pneg %p165
    $region26: #{tpu_custom_call.1} parent=5 // pred_check_branch
      %168 = sbr.rel (%p166) target = $region28
    $region27: #{tpu_custom_call.1} parent=5 // pred_region
      // Predicated region
      $region29: #{tpu_custom_call.1} parent=27 // pred_check
        %p169 = pneg %p44
      $region30: #{tpu_custom_call.1} parent=27 // pred_check_branch
        %171 = sbr.rel (%p169) target = $region32
      $region31: #{tpu_custom_call.1} parent=27 // pred_region
        %s172 = smul.u32 128, %s18
        %p173 = scmp.lt.s32.totalorder %s17, 1
        %s174 = scalar_select %p173, %s17, 1
        %p175 = scmp.lt.s32.totalorder %s172, 127
        %s176 = scalar_select %p175, %s172, 127
        %s177 = smul.addr %s174, 128
        %s178 = sadd.s32 %s176, %s177
        %s179 = smul.addr %s178, 4
        %s180 = scalar_lea.vmem %s0, %s179
        %s181 = smul.u32 128, %s18
      $region32: #{tpu_custom_call.1} parent=27 // pred_fallthru
        _
    $region28: #{tpu_custom_call.1} parent=5 // pred_fallthru
      _
    %p182 = scmp.le.s32.totalorder 1, %s10
    %p183 = scmp.lt.s32.totalorder %s10, 3
    %p184 = pnand %p182, %p183
    %p185 = pneg %p184
    // Predicated region
    $region33: #{tpu_custom_call.1} parent=5 // pred_check
      _
    $region34: #{tpu_custom_call.1} parent=5 // pred_check_branch
      %187 = sbr.rel (%p184) target = $region36
    $region35: #{tpu_custom_call.1} parent=5 // pred_region
      %s188 = ssub.s32 %s10, 1
      %s189 = smul.u32 128, %s20
      %p190 = scmp.lt.s32.totalorder %s19, 1
      %s191 = scalar_select %p190, %s19, 1
      %p192 = scmp.lt.s32.totalorder %s189, 127
      %s193 = scalar_select %p192, %s189, 127
      %s194 = smul.addr %s191, 128
      %s195 = sadd.s32 %s193, %s194
      %s196 = smul.addr %s195, 4
      %s197 = scalar_lea.vmem %s0, %s196
      %p198 = pneg %p50
      %p199 = pneg %p47
      %p200 = pneg %p71
      %p201 = pneg %p68
      %p202 = pneg %p92
      %p203 = pneg %p89
      %p204 = pneg %p113
      %p205 = pneg %p110
      %p206 = pneg %p141
      %p207 = pneg %p138
      %s208 = smul.u32 128, %s20
      %p209 = scmp.lt.s32.totalorder %s19, 1
      %s210 = scalar_select %p209, %s19, 1
      %p211 = scmp.lt.s32.totalorder %s208, 127
      %s212 = scalar_select %p211, %s208, 127
      %s213 = smul.addr %s210, 128
      %s214 = sadd.s32 %s212, %s213
      %s215 = smul.addr %s214, 4
      %s216 = scalar_lea.vmem %s4, %s215
      %s217 = smul.u32 128, %s20
      %p218 = scmp.lt.s32.totalorder %s19, 1
      %s219 = scalar_select %p218, %s19, 1
      %p220 = scmp.lt.s32.totalorder %s217, 127
      %s221 = scalar_select %p220, %s217, 127
      %s222 = smul.addr %s219, 128
      %s223 = sadd.s32 %s221, %s222
      %s224 = smul.addr %s223, 4
      %s225 = scalar_lea.vmem %s0, %s224
      %s226 = smul.u32 128, %s20
      %s227 = smul.u32 128, %s20
      %p228 = scmp.lt.s32.totalorder %s19, 1
      %s229 = scalar_select %p228, %s19, 1
      %p230 = scmp.lt.s32.totalorder %s227, 127
      %s231 = scalar_select %p230, %s227, 127
      %s232 = smul.addr %s229, 128
      %s233 = sadd.s32 %s231, %s232
      %s234 = smul.addr %s233, 4
      %s235 = scalar_lea.vmem %s4, %s234
      %s236 = smul.u32 128, %s20
      %v238 = vld [vmem:[%s225] sm:$0xf]
      %v239 = vld [vmem:[%s225 + $0x4] sm:$0xf]
      %v240 = vld [vmem:[%s225 + $0x8] sm:$0xf]
      %v241 = vld [vmem:[%s225 + $0xc] sm:$0xf]
      %v242 = vld [vmem:[%s225 + $0x10] sm:$0xf]
      %v243 = vld [vmem:[%s225 + $0x14] sm:$0xf]
      %v244 = vld [vmem:[%s225 + $0x18] sm:$0xf]
      %v245 = vld [vmem:[%s225 + $0x1c] sm:$0xf]
      %v246 = vld [vmem:[%s225 + $0x20] sm:$0xf]
      %v247 = vld [vmem:[%s225 + $0x24] sm:$0xf]
      %v248 = vld [vmem:[%s225 + $0x28] sm:$0xf]
      %v249 = vld [vmem:[%s225 + $0x2c] sm:$0xf]
      %v250 = vld [vmem:[%s225 + $0x30] sm:$0xf]
      %v251 = vld [vmem:[%s225 + $0x34] sm:$0xf]
      %v252 = vld [vmem:[%s225 + $0x38] sm:$0xf]
      %v253 = vld [vmem:[%s225 + $0x3c] sm:$0xf]
      %v254 = vld [vmem:[%s225 + $0x40] sm:$0xf]
      %v255 = vld [vmem:[%s225 + $0x44] sm:$0xf]
      %v256 = vld [vmem:[%s225 + $0x48] sm:$0xf]
      %v257 = vld [vmem:[%s225 + $0x4c] sm:$0xf]
      %v258 = vld [vmem:[%s225 + $0x50] sm:$0xf]
      %v259 = vld [vmem:[%s225 + $0x54] sm:$0xf]
      %v260 = vld [vmem:[%s225 + $0x58] sm:$0xf]
      %v261 = vld [vmem:[%s225 + $0x5c] sm:$0xf]
      %v262 = vld [vmem:[%s225 + $0x60] sm:$0xf]
      %v263 = vld [vmem:[%s225 + $0x64] sm:$0xf]
      %v264 = vld [vmem:[%s225 + $0x68] sm:$0xf]
      %v265 = vld [vmem:[%s225 + $0x6c] sm:$0xf]
      %v266 = vld [vmem:[%s225 + $0x70] sm:$0xf]
      %v267 = vld [vmem:[%s225 + $0x74] sm:$0xf]
      %v268 = vld [vmem:[%s225 + $0x78] sm:$0xf]
      %v269 = vld [vmem:[%s225 + $0x7c] sm:$0xf]
      %v270 = vld [vmem:[%s225 + $0x80] sm:$0xf]
      %v271 = vld [vmem:[%s225 + $0x84] sm:$0xf]
      %v272 = vld [vmem:[%s225 + $0x88] sm:$0xf]
      %v273 = vld [vmem:[%s225 + $0x8c] sm:$0xf]
      %v274 = vld [vmem:[%s225 + $0x90] sm:$0xf]
      %v275 = vld [vmem:[%s225 + $0x94] sm:$0xf]
      %v276 = vld [vmem:[%s225 + $0x98] sm:$0xf]
      %v277 = vld [vmem:[%s225 + $0x9c] sm:$0xf]
      %v278 = vld [vmem:[%s225 + $0xa0] sm:$0xf]
      %v279 = vld [vmem:[%s225 + $0xa4] sm:$0xf]
      %v280 = vld [vmem:[%s225 + $0xa8] sm:$0xf]
      %v281 = vld [vmem:[%s225 + $0xac] sm:$0xf]
      %v282 = vld [vmem:[%s225 + $0xb0] sm:$0xf]
      %v283 = vld [vmem:[%s225 + $0xb4] sm:$0xf]
      %v284 = vld [vmem:[%s225 + $0xb8] sm:$0xf]
      %v285 = vld [vmem:[%s225 + $0xbc] sm:$0xf]
      %v286 = vld [vmem:[%s225 + $0xc0] sm:$0xf]
      %v287 = vld [vmem:[%s225 + $0xc4] sm:$0xf]
      %v288 = vld [vmem:[%s225 + $0xc8] sm:$0xf]
      %v289 = vld [vmem:[%s225 + $0xcc] sm:$0xf]
      %v290 = vld [vmem:[%s225 + $0xd0] sm:$0xf]
      %v291 = vld [vmem:[%s225 + $0xd4] sm:$0xf]
      %v292 = vld [vmem:[%s225 + $0xd8] sm:$0xf]
      %v293 = vld [vmem:[%s225 + $0xdc] sm:$0xf]
      %v294 = vld [vmem:[%s225 + $0xe0] sm:$0xf]
      %v295 = vld [vmem:[%s225 + $0xe4] sm:$0xf]
      %v296 = vld [vmem:[%s225 + $0xe8] sm:$0xf]
      %v297 = vld [vmem:[%s225 + $0xec] sm:$0xf]
      %v298 = vld [vmem:[%s225 + $0xf0] sm:$0xf]
      %v299 = vld [vmem:[%s225 + $0xf4] sm:$0xf]
      %v300 = vld [vmem:[%s225 + $0xf8] sm:$0xf]
      %v301 = vld [vmem:[%s225 + $0xfc] sm:$0xf]
      %v302 = vld [vmem:[%s225 + $0x100] sm:$0xf]
      %v303 = vld [vmem:[%s225 + $0x104] sm:$0xf]
      %v304 = vld [vmem:[%s225 + $0x108] sm:$0xf]
      %v305 = vld [vmem:[%s225 + $0x10c] sm:$0xf]
      %v306 = vld [vmem:[%s225 + $0x110] sm:$0xf]
      %v307 = vld [vmem:[%s225 + $0x114] sm:$0xf]
      %v308 = vld [vmem:[%s225 + $0x118] sm:$0xf]
      %v309 = vld [vmem:[%s225 + $0x11c] sm:$0xf]
      %v310 = vld [vmem:[%s225 + $0x120] sm:$0xf]
      %v311 = vld [vmem:[%s225 + $0x124] sm:$0xf]
      %v312 = vld [vmem:[%s225 + $0x128] sm:$0xf]
      %v313 = vld [vmem:[%s225 + $0x12c] sm:$0xf]
      %v314 = vld [vmem:[%s225 + $0x130] sm:$0xf]
      %v315 = vld [vmem:[%s225 + $0x134] sm:$0xf]
      %v316 = vld [vmem:[%s225 + $0x138] sm:$0xf]
      %v317 = vld [vmem:[%s225 + $0x13c] sm:$0xf]
      %v318 = vld [vmem:[%s225 + $0x140] sm:$0xf]
      %v319 = vld [vmem:[%s225 + $0x144] sm:$0xf]
      %v320 = vld [vmem:[%s225 + $0x148] sm:$0xf]
      %v321 = vld [vmem:[%s225 + $0x14c] sm:$0xf]
      %v322 = vld [vmem:[%s225 + $0x150] sm:$0xf]
      %v323 = vld [vmem:[%s225 + $0x154] sm:$0xf]
      %v324 = vld [vmem:[%s225 + $0x158] sm:$0xf]
      %v325 = vld [vmem:[%s225 + $0x15c] sm:$0xf]
      %v326 = vld [vmem:[%s225 + $0x160] sm:$0xf]
      %v327 = vld [vmem:[%s225 + $0x164] sm:$0xf]
      %v328 = vld [vmem:[%s225 + $0x168] sm:$0xf]
      %v329 = vld [vmem:[%s225 + $0x16c] sm:$0xf]
      %v330 = vld [vmem:[%s225 + $0x170] sm:$0xf]
      %v331 = vld [vmem:[%s225 + $0x174] sm:$0xf]
      %v332 = vld [vmem:[%s225 + $0x178] sm:$0xf]
      %v333 = vld [vmem:[%s225 + $0x17c] sm:$0xf]
      %v334 = vld [vmem:[%s225 + $0x180] sm:$0xf]
      %v335 = vld [vmem:[%s225 + $0x184] sm:$0xf]
      %v336 = vld [vmem:[%s225 + $0x188] sm:$0xf]
      %v337 = vld [vmem:[%s225 + $0x18c] sm:$0xf]
      %v338 = vld [vmem:[%s225 + $0x190] sm:$0xf]
      %v339 = vld [vmem:[%s225 + $0x194] sm:$0xf]
      %v340 = vld [vmem:[%s225 + $0x198] sm:$0xf]
      %v341 = vld [vmem:[%s225 + $0x19c] sm:$0xf]
      %v342 = vld [vmem:[%s225 + $0x1a0] sm:$0xf]
      %v343 = vld [vmem:[%s225 + $0x1a4] sm:$0xf]
      %v344 = vld [vmem:[%s225 + $0x1a8] sm:$0xf]
      %v345 = vld [vmem:[%s225 + $0x1ac] sm:$0xf]
      %v346 = vld [vmem:[%s225 + $0x1b0] sm:$0xf]
      %v347 = vld [vmem:[%s225 + $0x1b4] sm:$0xf]
      %v348 = vld [vmem:[%s225 + $0x1b8] sm:$0xf]
      %v349 = vld [vmem:[%s225 + $0x1bc] sm:$0xf]
      %v350 = vld [vmem:[%s225 + $0x1c0] sm:$0xf]
      %v351 = vld [vmem:[%s225 + $0x1c4] sm:$0xf]
      %v352 = vld [vmem:[%s225 + $0x1c8] sm:$0xf]
      %v353 = vld [vmem:[%s225 + $0x1cc] sm:$0xf]
      %v354 = vld [vmem:[%s225 + $0x1d0] sm:$0xf]
      %v355 = vld [vmem:[%s225 + $0x1d4] sm:$0xf]
      %v356 = vld [vmem:[%s225 + $0x1d8] sm:$0xf]
      %v357 = vld [vmem:[%s225 + $0x1dc] sm:$0xf]
      %v358 = vld [vmem:[%s225 + $0x1e0] sm:$0xf]
      %v359 = vld [vmem:[%s225 + $0x1e4] sm:$0xf]
      %v360 = vld [vmem:[%s225 + $0x1e8] sm:$0xf]
      %v361 = vld [vmem:[%s225 + $0x1ec] sm:$0xf]
      %v362 = vld [vmem:[%s225 + $0x1f0] sm:$0xf]
      %v363 = vld [vmem:[%s225 + $0x1f4] sm:$0xf]
      %v364 = vld [vmem:[%s225 + $0x1f8] sm:$0xf]
      %v365 = vld [vmem:[%s225 + $0x1fc] sm:$0xf]
      %v366 = vld [vmem:[%s1] sm:$0xf]
      %v367 = vld [vmem:[%s1 + $0x4] sm:$0xf]
      %v368 = vld [vmem:[%s1 + $0x8] sm:$0xf]
      %v369 = vld [vmem:[%s1 + $0xc] sm:$0xf]
      %v498 = vunpack.c.l.b16 %v238
      %v499 = vunpack.c.l.b16 %v239
      %v500 = vunpack.c.l.b16 %v240
      %v501 = vunpack.c.l.b16 %v241
      %v502 = vunpack.c.l.b16 %v242
      %v503 = vunpack.c.l.b16 %v243
      %v504 = vunpack.c.l.b16 %v244
      %v505 = vunpack.c.l.b16 %v245
      %v506 = vunpack.c.l.b16 %v246
      %v507 = vunpack.c.l.b16 %v247
      %v508 = vunpack.c.l.b16 %v248
      %v509 = vunpack.c.l.b16 %v249
      %v510 = vunpack.c.l.b16 %v250
      %v511 = vunpack.c.l.b16 %v251
      %v512 = vunpack.c.l.b16 %v252
      %v513 = vunpack.c.l.b16 %v253
      %v514 = vunpack.c.l.b16 %v254
      %v515 = vunpack.c.l.b16 %v255
      %v516 = vunpack.c.l.b16 %v256
      %v517 = vunpack.c.l.b16 %v257
      %v518 = vunpack.c.l.b16 %v258
      %v519 = vunpack.c.l.b16 %v259
      %v520 = vunpack.c.l.b16 %v260
      %v521 = vunpack.c.l.b16 %v261
      %v522 = vunpack.c.l.b16 %v262
      %v523 = vunpack.c.l.b16 %v263
      %v524 = vunpack.c.l.b16 %v264
      %v525 = vunpack.c.l.b16 %v265
      %v526 = vunpack.c.l.b16 %v266
      %v527 = vunpack.c.l.b16 %v267
      %v528 = vunpack.c.l.b16 %v268
      %v529 = vunpack.c.l.b16 %v269
      %v530 = vunpack.c.l.b16 %v270
      %v531 = vunpack.c.l.b16 %v271
      %v532 = vunpack.c.l.b16 %v272
      %v533 = vunpack.c.l.b16 %v273
      %v534 = vunpack.c.l.b16 %v274
      %v535 = vunpack.c.l.b16 %v275
      %v536 = vunpack.c.l.b16 %v276
      %v537 = vunpack.c.l.b16 %v277
      %v538 = vunpack.c.l.b16 %v278
      %v539 = vunpack.c.l.b16 %v279
      %v540 = vunpack.c.l.b16 %v280
      %v541 = vunpack.c.l.b16 %v281
      %v542 = vunpack.c.l.b16 %v282
      %v543 = vunpack.c.l.b16 %v283
      %v544 = vunpack.c.l.b16 %v284
      %v545 = vunpack.c.l.b16 %v285
      %v546 = vunpack.c.l.b16 %v286
      %v547 = vunpack.c.l.b16 %v287
      %v548 = vunpack.c.l.b16 %v288
      %v549 = vunpack.c.l.b16 %v289
      %v550 = vunpack.c.l.b16 %v290
      %v551 = vunpack.c.l.b16 %v291
      %v552 = vunpack.c.l.b16 %v292
      %v553 = vunpack.c.l.b16 %v293
      %v554 = vunpack.c.l.b16 %v294
      %v555 = vunpack.c.l.b16 %v295
      %v556 = vunpack.c.l.b16 %v296
      %v557 = vunpack.c.l.b16 %v297
      %v558 = vunpack.c.l.b16 %v298
      %v559 = vunpack.c.l.b16 %v299
      %v560 = vunpack.c.l.b16 %v300
      %v561 = vunpack.c.l.b16 %v301
      %v562 = vunpack.c.l.b16 %v302
      %v563 = vunpack.c.l.b16 %v303
      %v564 = vunpack.c.l.b16 %v304
      %v565 = vunpack.c.l.b16 %v305
      %v566 = vunpack.c.l.b16 %v306
      %v567 = vunpack.c.l.b16 %v307
      %v568 = vunpack.c.l.b16 %v308
      %v569 = vunpack.c.l.b16 %v309
      %v570 = vunpack.c.l.b16 %v310
      %v571 = vunpack.c.l.b16 %v311
      %v572 = vunpack.c.l.b16 %v312
      %v573 = vunpack.c.l.b16 %v313
      %v574 = vunpack.c.l.b16 %v314
      %v575 = vunpack.c.l.b16 %v315
      %v576 = vunpack.c.l.b16 %v316
      %v577 = vunpack.c.l.b16 %v317
      %v578 = vunpack.c.l.b16 %v318
      %v579 = vunpack.c.l.b16 %v319
      %v580 = vunpack.c.l.b16 %v320
      %v581 = vunpack.c.l.b16 %v321
      %v582 = vunpack.c.l.b16 %v322
      %v583 = vunpack.c.l.b16 %v323
      %v584 = vunpack.c.l.b16 %v324
      %v585 = vunpack.c.l.b16 %v325
      %v586 = vunpack.c.l.b16 %v326
      %v587 = vunpack.c.l.b16 %v327
      %v588 = vunpack.c.l.b16 %v328
      %v589 = vunpack.c.l.b16 %v329
      %v590 = vunpack.c.l.b16 %v330
      %v591 = vunpack.c.l.b16 %v331
      %v592 = vunpack.c.l.b16 %v332
      %v593 = vunpack.c.l.b16 %v333
      %v594 = vunpack.c.l.b16 %v334
      %v595 = vunpack.c.l.b16 %v335
      %v596 = vunpack.c.l.b16 %v336
      %v597 = vunpack.c.l.b16 %v337
      %v598 = vunpack.c.l.b16 %v338
      %v599 = vunpack.c.l.b16 %v339
      %v600 = vunpack.c.l.b16 %v340
      %v601 = vunpack.c.l.b16 %v341
      %v602 = vunpack.c.l.b16 %v342
      %v603 = vunpack.c.l.b16 %v343
      %v604 = vunpack.c.l.b16 %v344
      %v605 = vunpack.c.l.b16 %v345
      %v606 = vunpack.c.l.b16 %v346
      %v607 = vunpack.c.l.b16 %v347
      %v608 = vunpack.c.l.b16 %v348
      %v609 = vunpack.c.l.b16 %v349
      %v610 = vunpack.c.l.b16 %v350
      %v611 = vunpack.c.l.b16 %v351
      %v612 = vunpack.c.l.b16 %v352
      %v613 = vunpack.c.l.b16 %v353
      %v614 = vunpack.c.l.b16 %v354
      %v615 = vunpack.c.l.b16 %v355
      %v616 = vunpack.c.l.b16 %v356
      %v617 = vunpack.c.l.b16 %v357
      %v618 = vunpack.c.l.b16 %v358
      %v619 = vunpack.c.l.b16 %v359
      %v620 = vunpack.c.l.b16 %v360
      %v621 = vunpack.c.l.b16 %v361
      %v622 = vunpack.c.l.b16 %v362
      %v623 = vunpack.c.l.b16 %v363
      %v624 = vunpack.c.l.b16 %v364
      %v625 = vunpack.c.l.b16 %v365
      %v626 = vpack.c.b16 %v499, %v498
      %v627 = vpack.c.b16 %v501, %v500
      %v628 = vpack.c.b16 %v503, %v502
      %v629 = vpack.c.b16 %v505, %v504
      %v630 = vpack.c.b16 %v507, %v506
      %v631 = vpack.c.b16 %v509, %v508
      %v632 = vpack.c.b16 %v511, %v510
      %v633 = vpack.c.b16 %v513, %v512
      %v634 = vpack.c.b16 %v515, %v514
      %v635 = vpack.c.b16 %v517, %v516
      %v636 = vpack.c.b16 %v519, %v518
      %v637 = vpack.c.b16 %v521, %v520
      %v638 = vpack.c.b16 %v523, %v522
      %v639 = vpack.c.b16 %v525, %v524
      %v640 = vpack.c.b16 %v527, %v526
      %v641 = vpack.c.b16 %v529, %v528
      %v642 = vpack.c.b16 %v531, %v530
      %v643 = vpack.c.b16 %v533, %v532
      %v644 = vpack.c.b16 %v535, %v534
      %v645 = vpack.c.b16 %v537, %v536
      %v646 = vpack.c.b16 %v539, %v538
      %v647 = vpack.c.b16 %v541, %v540
      %v648 = vpack.c.b16 %v543, %v542
      %v649 = vpack.c.b16 %v545, %v544
      %v650 = vpack.c.b16 %v547, %v546
      %v651 = vpack.c.b16 %v549, %v548
      %v652 = vpack.c.b16 %v551, %v550
      %v653 = vpack.c.b16 %v553, %v552
      %v654 = vpack.c.b16 %v555, %v554
      %v655 = vpack.c.b16 %v557, %v556
      %v656 = vpack.c.b16 %v559, %v558
      %v657 = vpack.c.b16 %v561, %v560
      %v658 = vpack.c.b16 %v563, %v562
      %v659 = vpack.c.b16 %v565, %v564
      %v660 = vpack.c.b16 %v567, %v566
      %v661 = vpack.c.b16 %v569, %v568
      %v662 = vpack.c.b16 %v571, %v570
      %v663 = vpack.c.b16 %v573, %v572
      %v664 = vpack.c.b16 %v575, %v574
      %v665 = vpack.c.b16 %v577, %v576
      %v666 = vpack.c.b16 %v579, %v578
      %v667 = vpack.c.b16 %v581, %v580
      %v668 = vpack.c.b16 %v583, %v582
      %v669 = vpack.c.b16 %v585, %v584
      %v670 = vpack.c.b16 %v587, %v586
      %v671 = vpack.c.b16 %v589, %v588
      %v672 = vpack.c.b16 %v591, %v590
      %v673 = vpack.c.b16 %v593, %v592
      %v674 = vpack.c.b16 %v595, %v594
      %v675 = vpack.c.b16 %v597, %v596
      %v676 = vpack.c.b16 %v599, %v598
      %v677 = vpack.c.b16 %v601, %v600
      %v678 = vpack.c.b16 %v603, %v602
      %v679 = vpack.c.b16 %v605, %v604
      %v680 = vpack.c.b16 %v607, %v606
      %v681 = vpack.c.b16 %v609, %v608
      %v682 = vpack.c.b16 %v611, %v610
      %v683 = vpack.c.b16 %v613, %v612
      %v684 = vpack.c.b16 %v615, %v614
      %v685 = vpack.c.b16 %v617, %v616
      %v686 = vpack.c.b16 %v619, %v618
      %v687 = vpack.c.b16 %v621, %v620
      %v688 = vpack.c.b16 %v623, %v622
      %v689 = vpack.c.b16 %v625, %v624
      %v694 = vunpack.c.l.b16 %v366
      %v695 = vunpack.c.l.b16 %v367
      %v696 = vunpack.c.l.b16 %v368
      %v697 = vunpack.c.l.b16 %v369
      %v698 = vpack.c.b16 %v695, %v694
      %v699 = vpack.c.b16 %v697, %v696
      %vm702 = vcmask 261120
      %v704 = vsel %vm702, %v626, 0
      %v707 = vsel %vm702, %v627, 0
      %v710 = vsel %vm702, %v628, 0
      %v713 = vsel %vm702, %v629, 0
      %v716 = vsel %vm702, %v630, 0
      %v719 = vsel %vm702, %v631, 0
      %v722 = vsel %vm702, %v632, 0
      %v725 = vsel %vm702, %v633, 0
      %v728 = vsel %vm702, %v634, 0
      %v731 = vsel %vm702, %v635, 0
      %v734 = vsel %vm702, %v636, 0
      %v737 = vsel %vm702, %v637, 0
      %v740 = vsel %vm702, %v638, 0
      %v743 = vsel %vm702, %v639, 0
      %v746 = vsel %vm702, %v640, 0
      %v749 = vsel %vm702, %v641, 0
      %v752 = vsel %vm702, %v642, 0
      %v755 = vsel %vm702, %v643, 0
      %v758 = vsel %vm702, %v644, 0
      %v761 = vsel %vm702, %v645, 0
      %v764 = vsel %vm702, %v646, 0
      %v767 = vsel %vm702, %v647, 0
      %v770 = vsel %vm702, %v648, 0
      %v773 = vsel %vm702, %v649, 0
      %v776 = vsel %vm702, %v650, 0
      %v779 = vsel %vm702, %v651, 0
      %v782 = vsel %vm702, %v652, 0
      %v785 = vsel %vm702, %v653, 0
      %v788 = vsel %vm702, %v654, 0
      %v791 = vsel %vm702, %v655, 0
      %v794 = vsel %vm702, %v656, 0
      %v797 = vsel %vm702, %v657, 0
      %v800 = vsel %vm702, %v658, 0
      %v803 = vsel %vm702, %v659, 0
      %v806 = vsel %vm702, %v660, 0
      %v809 = vsel %vm702, %v661, 0
      %v812 = vsel %vm702, %v662, 0
      %v815 = vsel %vm702, %v663, 0
      %v818 = vsel %vm702, %v664, 0
      %v821 = vsel %vm702, %v665, 0
      %v824 = vsel %vm702, %v666, 0
      %v827 = vsel %vm702, %v667, 0
      %v830 = vsel %vm702, %v668, 0
      %v833 = vsel %vm702, %v669, 0
      %v836 = vsel %vm702, %v670, 0
      %v839 = vsel %vm702, %v671, 0
      %v842 = vsel %vm702, %v672, 0
      %v845 = vsel %vm702, %v673, 0
      %v848 = vsel %vm702, %v674, 0
      %v851 = vsel %vm702, %v675, 0
      %v854 = vsel %vm702, %v676, 0
      %v857 = vsel %vm702, %v677, 0
      %v860 = vsel %vm702, %v678, 0
      %v863 = vsel %vm702, %v679, 0
      %v866 = vsel %vm702, %v680, 0
      %v869 = vsel %vm702, %v681, 0
      %v872 = vsel %vm702, %v682, 0
      %v875 = vsel %vm702, %v683, 0
      %v878 = vsel %vm702, %v684, 0
      %v881 = vsel %vm702, %v685, 0
      %v884 = vsel %vm702, %v686, 0
      %v887 = vsel %vm702, %v687, 0
      %v890 = vsel %vm702, %v688, 0
      %v893 = vsel %vm702, %v689, 0
      %895 = vmatprep.subr.bf16.mxu0 0
      %896 = vmatpush1.bf16.msra.mxu0 %v698
      %897 = vmatprep.subr.bf16.mxu0 0
      %898 = vmatpush1.bf16.msra.mxu0 %v699
      %899 = vmatprep.subr.bf16.mxu0 0
      %900 = vmatpush1.bf16.msra.mxu0 0
      %901 = vmatprep.subr.bf16.mxu0 0
      %902 = vmatpush1.bf16.msra.mxu0 0
      %903 = vmatprep.subr.bf16.mxu0 0
      %904 = vmatpush1.bf16.msra.mxu0 0
      %905 = vmatprep.subr.bf16.mxu0 0
      %906 = vmatpush1.bf16.msra.mxu0 0
      %907 = vmatprep.subr.bf16.mxu0 0
      %908 = vmatpush1.bf16.msra.mxu0 0
      %909 = vmatprep.subr.bf16.mxu0 0
      %910 = vmatpush1.bf16.msra.mxu0 0
      %911 = vmatprep.subr.bf16.mxu0 0
      %912 = vmatpush1.bf16.msra.mxu0 0
      %913 = vmatprep.subr.bf16.mxu0 0
      %914 = vmatpush1.bf16.msra.mxu0 0
      %915 = vmatprep.subr.bf16.mxu0 0
      %916 = vmatpush1.bf16.msra.mxu0 0
      %917 = vmatprep.subr.bf16.mxu0 0
      %918 = vmatpush1.bf16.msra.mxu0 0
      %919 = vmatprep.subr.bf16.mxu0 0
      %920 = vmatpush1.bf16.msra.mxu0 0
      %921 = vmatprep.subr.bf16.mxu0 0
      %922 = vmatpush1.bf16.msra.mxu0 0
      %923 = vmatprep.subr.bf16.mxu0 0
      %924 = vmatpush1.bf16.msra.mxu0 0
      %925 = vmatprep.subr.bf16.mxu0 0
      %926 = vmatpush1.bf16.msra.mxu0 0
      %927 = vmatprep.mubr.bf16.mxu0 0
      %928 = vmatmul.mubr.bf16.gmra.mrb[0].mxu0 %v704
      %v929 = vpop.f32.mrb[0].mxu0
      %v930 = vadd.f32 0.0, %v929
      %v931 = vpop.f32.mrb[0].mxu0
      %v932 = vpop.f32.mrb[0].mxu0
      %v933 = vadd.f32 0.0, %v932
      %v934 = vpop.f32.mrb[0].mxu0
      %935 = vmatprep.mubr.bf16.mxu0 0
      %936 = vmatmul.mubr.bf16.gmra.mrb[0].mxu0 %v707
      %v937 = vpop.f32.mrb[0].mxu0
      %v938 = vadd.f32 0.0, %v937
      %v939 = vpop.f32.mrb[0].mxu0
      %v940 = vpop.f32.mrb[0].mxu0
      %v941 = vadd.f32 0.0, %v940
      %v942 = vpop.f32.mrb[0].mxu0
      %943 = vmatprep.mubr.bf16.mxu0 0
      %944 = vmatmul.mubr.bf16.gmra.mrb[0].mxu0 %v710
      %v945 = vpop.f32.mrb[0].mxu0
      %v946 = vadd.f32 0.0, %v945
      %v947 = vpop.f32.mrb[0].mxu0
      %v948 = vpop.f32.mrb[0].mxu0
      %v949 = vadd.f32 0.0, %v948
      %v950 = vpop.f32.mrb[0].mxu0
      %951 = vmatprep.mubr.bf16.mxu0 0
      %952 = vmatmul.mubr.bf16.gmra.mrb[0].mxu0 %v713
      %v953 = vpop.f32.mrb[0].mxu0
      %v954 = vadd.f32 0.0, %v953
      %v955 = vpop.f32.mrb[0].mxu0
      %v956 = vpop.f32.mrb[0].mxu0
      %v957 = vadd.f32 0.0, %v956
      %v958 = vpop.f32.mrb[0].mxu0
      %959 = vmatprep.mubr.bf16.mxu0 0
      %960 = vmatmul.mubr.bf16.gmra.mrb[0].mxu0 %v716
      %v961 = vpop.f32.mrb[0].mxu0
      %v962 = vadd.f32 0.0, %v961
      %v963 = vpop.f32.mrb[0].mxu0
      %v964 = vpop.f32.mrb[0].mxu0
      %v965 = vadd.f32 0.0, %v964
      %v966 = vpop.f32.mrb[0].mxu0
      %967 = vmatprep.mubr.bf16.mxu0 0
      %968 = vmatmul.mubr.bf16.gmra.mrb[0].mxu0 %v719
      %v969 = vpop.f32.mrb[0].mxu0
      %v970 = vadd.f32 0.0, %v969
      %v971 = vpop.f32.mrb[0].mxu0
      %v972 = vpop.f32.mrb[0].mxu0
      %v973 = vadd.f32 0.0, %v972
      %v974 = vpop.f32.mrb[0].mxu0
      %975 = vmatprep.mubr.bf16.mxu0 0
      %976 = vmatmul.mubr.bf16.gmra.mrb[0].mxu0 %v722
      %v977 = vpop.f32.mrb[0].mxu0
      %v978 = vadd.f32 0.0, %v977
      %v979 = vpop.f32.mrb[0].mxu0
      %v980 = vpop.f32.mrb[0].mxu0
      %v981 = vadd.f32 0.0, %v980
      %v982 = vpop.f32.mrb[0].mxu0
      %983 = vmatprep.mubr.bf16.mxu0 0
      %984 = vmatmul.mubr.bf16.gmra.mrb[0].mxu0 %v725
      %v985 = vpop.f32.mrb[0].mxu0
      %v986 = vadd.f32 0.0, %v985
      %v987 = vpop.f32.mrb[0].mxu0
      %v988 = vpop.f32.mrb[0].mxu0
      %v989 = vadd.f32 0.0, %v988
      %v990 = vpop.f32.mrb[0].mxu0
      %991 = vmatprep.mubr.bf16.mxu0 0
      %992 = vmatmul.mubr.bf16.gmra.mrb[0].mxu0 %v728
      %v993 = vpop.f32.mrb[0].mxu0
      %v994 = vadd.f32 0.0, %v993
      %v995 = vpop.f32.mrb[0].mxu0
      %v996 = vpop.f32.mrb[0].mxu0
      %v997 = vadd.f32 0.0, %v996
      %v998 = vpop.f32.mrb[0].mxu0
      %999 = vmatprep.mubr.bf16.mxu0 0
      %1000 = vmatmul.mubr.bf16.gmra.mrb[0].mxu0 %v731
      %v1001 = vpop.f32.mrb[0].mxu0
      %v1002 = vadd.f32 0.0, %v1001
      %v1003 = vpop.f32.mrb[0].mxu0
      %v1004 = vpop.f32.mrb[0].mxu0
      %v1005 = vadd.f32 0.0, %v1004
      %v1006 = vpop.f32.mrb[0].mxu0
      %1007 = vmatprep.mubr.bf16.mxu0 0
      %1008 = vmatmul.mubr.bf16.gmra.mrb[0].mxu0 %v734
      %v1009 = vpop.f32.mrb[0].mxu0
      %v1010 = vadd.f32 0.0, %v1009
      %v1011 = vpop.f32.mrb[0].mxu0
      %v1012 = vpop.f32.mrb[0].mxu0
      %v1013 = vadd.f32 0.0, %v1012
      %v1014 = vpop.f32.mrb[0].mxu0
      %1015 = vmatprep.mubr.bf16.mxu0 0
      %1016 = vmatmul.mubr.bf16.gmra.mrb[0].mxu0 %v737
      %v1017 = vpop.f32.mrb[0].mxu0
      %v1018 = vadd.f32 0.0, %v1017
      %v1019 = vpop.f32.mrb[0].mxu0
      %v1020 = vpop.f32.mrb[0].mxu0
      %v1021 = vadd.f32 0.0, %v1020
      %v1022 = vpop.f32.mrb[0].mxu0
      %1023 = vmatprep.mubr.bf16.mxu0 0
      %1024 = vmatmul.mubr.bf16.gmra.mrb[0].mxu0 %v740
      %v1025 = vpop.f32.mrb[0].mxu0
      %v1026 = vadd.f32 0.0, %v1025
      %v1027 = vpop.f32.mrb[0].mxu0
      %v1028 = vpop.f32.mrb[0].mxu0
      %v1029 = vadd.f32 0.0, %v1028
      %v1030 = vpop.f32.mrb[0].mxu0
      %1031 = vmatprep.mubr.bf16.mxu0 0
      %1032 = vmatmul.mubr.bf16.gmra.mrb[0].mxu0 %v743
      %v1033 = vpop.f32.mrb[0].mxu0
      %v1034 = vadd.f32 0.0, %v1033
      %v1035 = vpop.f32.mrb[0].mxu0
      %v1036 = vpop.f32.mrb[0].mxu0
      %v1037 = vadd.f32 0.0, %v1036
      %v1038 = vpop.f32.mrb[0].mxu0
      %1039 = vmatprep.mubr.bf16.mxu0 0
      %1040 = vmatmul.mubr.bf16.gmra.mrb[0].mxu0 %v746
      %v1041 = vpop.f32.mrb[0].mxu0
      %v1042 = vadd.f32 0.0, %v1041
      %v1043 = vpop.f32.mrb[0].mxu0
      %v1044 = vpop.f32.mrb[0].mxu0
      %v1045 = vadd.f32 0.0, %v1044
      %v1046 = vpop.f32.mrb[0].mxu0
      %1047 = vmatprep.mubr.bf16.mxu0 0
      %1048 = vmatmul.mubr.bf16.gmra.mrb[0].mxu0 %v749
      %v1049 = vpop.f32.mrb[0].mxu0
      %v1050 = vadd.f32 0.0, %v1049
      %v1051 = vpop.f32.mrb[0].mxu0
      %v1052 = vpop.f32.mrb[0].mxu0
      %v1053 = vadd.f32 0.0, %v1052
      %v1054 = vpop.f32.mrb[0].mxu0
      %1055 = vmatprep.mubr.bf16.mxu0 0
      %1056 = vmatmul.mubr.bf16.gmra.mrb[0].mxu0 %v752
      %v1057 = vpop.f32.mrb[0].mxu0
      %v1058 = vadd.f32 0.0, %v1057
      %v1059 = vpop.f32.mrb[0].mxu0
      %v1060 = vpop.f32.mrb[0].mxu0
      %v1061 = vadd.f32 0.0, %v1060
      %v1062 = vpop.f32.mrb[0].mxu0
      %1063 = vmatprep.mubr.bf16.mxu0 0
      %1064 = vmatmul.mubr.bf16.gmra.mrb[0].mxu0 %v755
      %v1065 = vpop.f32.mrb[0].mxu0
      %v1066 = vadd.f32 0.0, %v1065
      %v1067 = vpop.f32.mrb[0].mxu0
      %v1068 = vpop.f32.mrb[0].mxu0
      %v1069 = vadd.f32 0.0, %v1068
      %v1070 = vpop.f32.mrb[0].mxu0
      %1071 = vmatprep.mubr.bf16.mxu0 0
      %1072 = vmatmul.mubr.bf16.gmra.mrb[0].mxu0 %v758
      %v1073 = vpop.f32.mrb[0].mxu0
      %v1074 = vadd.f32 0.0, %v1073
      %v1075 = vpop.f32.mrb[0].mxu0
      %v1076 = vpop.f32.mrb[0].mxu0
      %v1077 = vadd.f32 0.0, %v1076
      %v1078 = vpop.f32.mrb[0].mxu0
      %1079 = vmatprep.mubr.bf16.mxu0 0
      %1080 = vmatmul.mubr.bf16.gmra.mrb[0].mxu0 %v761
      %v1081 = vpop.f32.mrb[0].mxu0
      %v1082 = vadd.f32 0.0, %v1081
      %v1083 = vpop.f32.mrb[0].mxu0
      %v1084 = vpop.f32.mrb[0].mxu0
      %v1085 = vadd.f32 0.0, %v1084
      %v1086 = vpop.f32.mrb[0].mxu0
      %1087 = vmatprep.mubr.bf16.mxu0 0
      %1088 = vmatmul.mubr.bf16.gmra.mrb[0].mxu0 %v764
      %v1089 = vpop.f32.mrb[0].mxu0
      %v1090 = vadd.f32 0.0, %v1089
      %v1091 = vpop.f32.mrb[0].mxu0
      %v1092 = vpop.f32.mrb[0].mxu0
      %v1093 = vadd.f32 0.0, %v1092
      %v1094 = vpop.f32.mrb[0].mxu0
      %1095 = vmatprep.mubr.bf16.mxu0 0
      %1096 = vmatmul.mubr.bf16.gmra.mrb[0].mxu0 %v767
      %v1097 = vpop.f32.mrb[0].mxu0
      %v1098 = vadd.f32 0.0, %v1097
      %v1099 = vpop.f32.mrb[0].mxu0
      %v1100 = vpop.f32.mrb[0].mxu0
      %v1101 = vadd.f32 0.0, %v1100
      %v1102 = vpop.f32.mrb[0].mxu0
      %1103 = vmatprep.mubr.bf16.mxu0 0
      %1104 = vmatmul.mubr.bf16.gmra.mrb[0].mxu0 %v770
      %v1105 = vpop.f32.mrb[0].mxu0
      %v1106 = vadd.f32 0.0, %v1105
      %v1107 = vpop.f32.mrb[0].mxu0
      %v1108 = vpop.f32.mrb[0].mxu0
      %v1109 = vadd.f32 0.0, %v1108
      %v1110 = vpop.f32.mrb[0].mxu0
      %1111 = vmatprep.mubr.bf16.mxu0 0
      %1112 = vmatmul.mubr.bf16.gmra.mrb[0].mxu0 %v773
      %v1113 = vpop.f32.mrb[0].mxu0
      %v1114 = vadd.f32 0.0, %v1113
      %v1115 = vpop.f32.mrb[0].mxu0
      %v1116 = vpop.f32.mrb[0].mxu0
      %v1117 = vadd.f32 0.0, %v1116
      %v1118 = vpop.f32.mrb[0].mxu0
      %1119 = vmatprep.mubr.bf16.mxu0 0
      %1120 = vmatmul.mubr.bf16.gmra.mrb[0].mxu0 %v776
      %v1121 = vpop.f32.mrb[0].mxu0
      %v1122 = vadd.f32 0.0, %v1121
      %v1123 = vpop.f32.mrb[0].mxu0
      %v1124 = vpop.f32.mrb[0].mxu0
      %v1125 = vadd.f32 0.0, %v1124
      %v1126 = vpop.f32.mrb[0].mxu0
      %1127 = vmatprep.mubr.bf16.mxu0 0
      %1128 = vmatmul.mubr.bf16.gmra.mrb[0].mxu0 %v779
      %v1129 = vpop.f32.mrb[0].mxu0
      %v1130 = vadd.f32 0.0, %v1129
      %v1131 = vpop.f32.mrb[0].mxu0
      %v1132 = vpop.f32.mrb[0].mxu0
      %v1133 = vadd.f32 0.0, %v1132
      %v1134 = vpop.f32.mrb[0].mxu0
      %1135 = vmatprep.mubr.bf16.mxu0 0
      %1136 = vmatmul.mubr.bf16.gmra.mrb[0].mxu0 %v782
      %v1137 = vpop.f32.mrb[0].mxu0
      %v1138 = vadd.f32 0.0, %v1137
      %v1139 = vpop.f32.mrb[0].mxu0
      %v1140 = vpop.f32.mrb[0].mxu0
      %v1141 = vadd.f32 0.0, %v1140
      %v1142 = vpop.f32.mrb[0].mxu0
      %1143 = vmatprep.mubr.bf16.mxu0 0
      %1144 = vmatmul.mubr.bf16.gmra.mrb[0].mxu0 %v785
      %v1145 = vpop.f32.mrb[0].mxu0
      %v1146 = vadd.f32 0.0, %v1145
      %v1147 = vpop.f32.mrb[0].mxu0
      %v1148 = vpop.f32.mrb[0].mxu0
      %v1149 = vadd.f32 0.0, %v1148
      %v1150 = vpop.f32.mrb[0].mxu0
      %1151 = vmatprep.mubr.bf16.mxu0 0
      %1152 = vmatmul.mubr.bf16.gmra.mrb[0].mxu0 %v788
      %v1153 = vpop.f32.mrb[0].mxu0
      %v1154 = vadd.f32 0.0, %v1153
      %v1155 = vpop.f32.mrb[0].mxu0
      %v1156 = vpop.f32.mrb[0].mxu0
      %v1157 = vadd.f32 0.0, %v1156
      %v1158 = vpop.f32.mrb[0].mxu0
      %1159 = vmatprep.mubr.bf16.mxu0 0
      %1160 = vmatmul.mubr.bf16.gmra.mrb[0].mxu0 %v791
      %v1161 = vpop.f32.mrb[0].mxu0
      %v1162 = vadd.f32 0.0, %v1161
      %v1163 = vpop.f32.mrb[0].mxu0
      %v1164 = vpop.f32.mrb[0].mxu0
      %v1165 = vadd.f32 0.0, %v1164
      %v1166 = vpop.f32.mrb[0].mxu0
      %1167 = vmatprep.mubr.bf16.mxu0 0
      %1168 = vmatmul.mubr.bf16.gmra.mrb[0].mxu0 %v794
      %v1169 = vpop.f32.mrb[0].mxu0
      %v1170 = vadd.f32 0.0, %v1169
      %v1171 = vpop.f32.mrb[0].mxu0
      %v1172 = vpop.f32.mrb[0].mxu0
      %v1173 = vadd.f32 0.0, %v1172
      %v1174 = vpop.f32.mrb[0].mxu0
      %1175 = vmatprep.mubr.bf16.mxu0 0
      %1176 = vmatmul.mubr.bf16.gmra.mrb[0].mxu0 %v797
      %v1177 = vpop.f32.mrb[0].mxu0
      %v1178 = vadd.f32 0.0, %v1177
      %v1179 = vpop.f32.mrb[0].mxu0
      %v1180 = vpop.f32.mrb[0].mxu0
      %v1181 = vadd.f32 0.0, %v1180
      %v1182 = vpop.f32.mrb[0].mxu0
      %1183 = vmatprep.mubr.bf16.mxu0 0
      %1184 = vmatmul.mubr.bf16.gmra.mrb[0].mxu0 %v800
      %v1185 = vpop.f32.mrb[0].mxu0
      %v1186 = vadd.f32 0.0, %v1185
      %v1187 = vpop.f32.mrb[0].mxu0
      %v1188 = vpop.f32.mrb[0].mxu0
      %v1189 = vadd.f32 0.0, %v1188
      %v1190 = vpop.f32.mrb[0].mxu0
      %1191 = vmatprep.mubr.bf16.mxu0 0
      %1192 = vmatmul.mubr.bf16.gmra.mrb[0].mxu0 %v803
      %v1193 = vpop.f32.mrb[0].mxu0
      %v1194 = vadd.f32 0.0, %v1193
      %v1195 = vpop.f32.mrb[0].mxu0
      %v1196 = vpop.f32.mrb[0].mxu0
      %v1197 = vadd.f32 0.0, %v1196
      %v1198 = vpop.f32.mrb[0].mxu0
      %1199 = vmatprep.mubr.bf16.mxu0 0
      %1200 = vmatmul.mubr.bf16.gmra.mrb[0].mxu0 %v806
      %v1201 = vpop.f32.mrb[0].mxu0
      %v1202 = vadd.f32 0.0, %v1201
      %v1203 = vpop.f32.mrb[0].mxu0
      %v1204 = vpop.f32.mrb[0].mxu0
      %v1205 = vadd.f32 0.0, %v1204
      %v1206 = vpop.f32.mrb[0].mxu0
      %1207 = vmatprep.mubr.bf16.mxu0 0
      %1208 = vmatmul.mubr.bf16.gmra.mrb[0].mxu0 %v809
      %v1209 = vpop.f32.mrb[0].mxu0
      %v1210 = vadd.f32 0.0, %v1209
      %v1211 = vpop.f32.mrb[0].mxu0
      %v1212 = vpop.f32.mrb[0].mxu0
      %v1213 = vadd.f32 0.0, %v1212
      %v1214 = vpop.f32.mrb[0].mxu0
      %1215 = vmatprep.mubr.bf16.mxu0 0
      %1216 = vmatmul.mubr.bf16.gmra.mrb[0].mxu0 %v812
      %v1217 = vpop.f32.mrb[0].mxu0
      %v1218 = vadd.f32 0.0, %v1217
      %v1219 = vpop.f32.mrb[0].mxu0
      %v1220 = vpop.f32.mrb[0].mxu0
      %v1221 = vadd.f32 0.0, %v1220
      %v1222 = vpop.f32.mrb[0].mxu0
      %1223 = vmatprep.mubr.bf16.mxu0 0
      %1224 = vmatmul.mubr.bf16.gmra.mrb[0].mxu0 %v815
      %v1225 = vpop.f32.mrb[0].mxu0
      %v1226 = vadd.f32 0.0, %v1225
      %v1227 = vpop.f32.mrb[0].mxu0
      %v1228 = vpop.f32.mrb[0].mxu0
      %v1229 = vadd.f32 0.0, %v1228
      %v1230 = vpop.f32.mrb[0].mxu0
      %1231 = vmatprep.mubr.bf16.mxu0 0
      %1232 = vmatmul.mubr.bf16.gmra.mrb[0].mxu0 %v818
      %v1233 = vpop.f32.mrb[0].mxu0
      %v1234 = vadd.f32 0.0, %v1233
      %v1235 = vpop.f32.mrb[0].mxu0
      %v1236 = vpop.f32.mrb[0].mxu0
      %v1237 = vadd.f32 0.0, %v1236
      %v1238 = vpop.f32.mrb[0].mxu0
      %1239 = vmatprep.mubr.bf16.mxu0 0
      %1240 = vmatmul.mubr.bf16.gmra.mrb[0].mxu0 %v821
      %v1241 = vpop.f32.mrb[0].mxu0
      %v1242 = vadd.f32 0.0, %v1241
      %v1243 = vpop.f32.mrb[0].mxu0
      %v1244 = vpop.f32.mrb[0].mxu0
      %v1245 = vadd.f32 0.0, %v1244
      %v1246 = vpop.f32.mrb[0].mxu0
      %1247 = vmatprep.mubr.bf16.mxu0 0
      %1248 = vmatmul.mubr.bf16.gmra.mrb[0].mxu0 %v824
      %v1249 = vpop.f32.mrb[0].mxu0
      %v1250 = vadd.f32 0.0, %v1249
      %v1251 = vpop.f32.mrb[0].mxu0
      %v1252 = vpop.f32.mrb[0].mxu0
      %v1253 = vadd.f32 0.0, %v1252
      %v1254 = vpop.f32.mrb[0].mxu0
      %1255 = vmatprep.mubr.bf16.mxu0 0
      %1256 = vmatmul.mubr.bf16.gmra.mrb[0].mxu0 %v827
      %v1257 = vpop.f32.mrb[0].mxu0
      %v1258 = vadd.f32 0.0, %v1257
      %v1259 = vpop.f32.mrb[0].mxu0
      %v1260 = vpop.f32.mrb[0].mxu0
      %v1261 = vadd.f32 0.0, %v1260
      %v1262 = vpop.f32.mrb[0].mxu0
      %1263 = vmatprep.mubr.bf16.mxu0 0
      %1264 = vmatmul.mubr.bf16.gmra.mrb[0].mxu0 %v830
      %v1265 = vpop.f32.mrb[0].mxu0
      %v1266 = vadd.f32 0.0, %v1265
      %v1267 = vpop.f32.mrb[0].mxu0
      %v1268 = vpop.f32.mrb[0].mxu0
      %v1269 = vadd.f32 0.0, %v1268
      %v1270 = vpop.f32.mrb[0].mxu0
      %1271 = vmatprep.mubr.bf16.mxu0 0
      %1272 = vmatmul.mubr.bf16.gmra.mrb[0].mxu0 %v833
      %v1273 = vpop.f32.mrb[0].mxu0
      %v1274 = vadd.f32 0.0, %v1273
      %v1275 = vpop.f32.mrb[0].mxu0
      %v1276 = vpop.f32.mrb[0].mxu0
      %v1277 = vadd.f32 0.0, %v1276
      %v1278 = vpop.f32.mrb[0].mxu0
      %1279 = vmatprep.mubr.bf16.mxu0 0
      %1280 = vmatmul.mubr.bf16.gmra.mrb[0].mxu0 %v836
      %v1281 = vpop.f32.mrb[0].mxu0
      %v1282 = vadd.f32 0.0, %v1281
      %v1283 = vpop.f32.mrb[0].mxu0
      %v1284 = vpop.f32.mrb[0].mxu0
      %v1285 = vadd.f32 0.0, %v1284
      %v1286 = vpop.f32.mrb[0].mxu0
      %1287 = vmatprep.mubr.bf16.mxu0 0
      %1288 = vmatmul.mubr.bf16.gmra.mrb[0].mxu0 %v839
      %v1289 = vpop.f32.mrb[0].mxu0
      %v1290 = vadd.f32 0.0, %v1289
      %v1291 = vpop.f32.mrb[0].mxu0
      %v1292 = vpop.f32.mrb[0].mxu0
      %v1293 = vadd.f32 0.0, %v1292
      %v1294 = vpop.f32.mrb[0].mxu0
      %1295 = vmatprep.mubr.bf16.mxu0 0
      %1296 = vmatmul.mubr.bf16.gmra.mrb[0].mxu0 %v842
      %v1297 = vpop.f32.mrb[0].mxu0
      %v1298 = vadd.f32 0.0, %v1297
      %v1299 = vpop.f32.mrb[0].mxu0
      %v1300 = vpop.f32.mrb[0].mxu0
      %v1301 = vadd.f32 0.0, %v1300
      %v1302 = vpop.f32.mrb[0].mxu0
      %1303 = vmatprep.mubr.bf16.mxu0 0
      %1304 = vmatmul.mubr.bf16.gmra.mrb[0].mxu0 %v845
      %v1305 = vpop.f32.mrb[0].mxu0
      %v1306 = vadd.f32 0.0, %v1305
      %v1307 = vpop.f32.mrb[0].mxu0
      %v1308 = vpop.f32.mrb[0].mxu0
      %v1309 = vadd.f32 0.0, %v1308
      %v1310 = vpop.f32.mrb[0].mxu0
      %1311 = vmatprep.mubr.bf16.mxu0 0
      %1312 = vmatmul.mubr.bf16.gmra.mrb[0].mxu0 %v848
      %v1313 = vpop.f32.mrb[0].mxu0
      %v1314 = vadd.f32 0.0, %v1313
      %v1315 = vpop.f32.mrb[0].mxu0
      %v1316 = vpop.f32.mrb[0].mxu0
      %v1317 = vadd.f32 0.0, %v1316
      %v1318 = vpop.f32.mrb[0].mxu0
      %1319 = vmatprep.mubr.bf16.mxu0 0
      %1320 = vmatmul.mubr.bf16.gmra.mrb[0].mxu0 %v851
      %v1321 = vpop.f32.mrb[0].mxu0
      %v1322 = vadd.f32 0.0, %v1321
      %v1323 = vpop.f32.mrb[0].mxu0
      %v1324 = vpop.f32.mrb[0].mxu0
      %v1325 = vadd.f32 0.0, %v1324
      %v1326 = vpop.f32.mrb[0].mxu0
      %1327 = vmatprep.mubr.bf16.mxu0 0
      %1328 = vmatmul.mubr.bf16.gmra.mrb[0].mxu0 %v854
      %v1329 = vpop.f32.mrb[0].mxu0
      %v1330 = vadd.f32 0.0, %v1329
      %v1331 = vpop.f32.mrb[0].mxu0
      %v1332 = vpop.f32.mrb[0].mxu0
      %v1333 = vadd.f32 0.0, %v1332
      %v1334 = vpop.f32.mrb[0].mxu0
      %1335 = vmatprep.mubr.bf16.mxu0 0
      %1336 = vmatmul.mubr.bf16.gmra.mrb[0].mxu0 %v857
      %v1337 = vpop.f32.mrb[0].mxu0
      %v1338 = vadd.f32 0.0, %v1337
      %v1339 = vpop.f32.mrb[0].mxu0
      %v1340 = vpop.f32.mrb[0].mxu0
      %v1341 = vadd.f32 0.0, %v1340
      %v1342 = vpop.f32.mrb[0].mxu0
      %1343 = vmatprep.mubr.bf16.mxu0 0
      %1344 = vmatmul.mubr.bf16.gmra.mrb[0].mxu0 %v860
      %v1345 = vpop.f32.mrb[0].mxu0
      %v1346 = vadd.f32 0.0, %v1345
      %v1347 = vpop.f32.mrb[0].mxu0
      %v1348 = vpop.f32.mrb[0].mxu0
      %v1349 = vadd.f32 0.0, %v1348
      %v1350 = vpop.f32.mrb[0].mxu0
      %1351 = vmatprep.mubr.bf16.mxu0 0
      %1352 = vmatmul.mubr.bf16.gmra.mrb[0].mxu0 %v863
      %v1353 = vpop.f32.mrb[0].mxu0
      %v1354 = vadd.f32 0.0, %v1353
      %v1355 = vpop.f32.mrb[0].mxu0
      %v1356 = vpop.f32.mrb[0].mxu0
      %v1357 = vadd.f32 0.0, %v1356
      %v1358 = vpop.f32.mrb[0].mxu0
      %1359 = vmatprep.mubr.bf16.mxu0 0
      %1360 = vmatmul.mubr.bf16.gmra.mrb[0].mxu0 %v866
      %v1361 = vpop.f32.mrb[0].mxu0
      %v1362 = vadd.f32 0.0, %v1361
      %v1363 = vpop.f32.mrb[0].mxu0
      %v1364 = vpop.f32.mrb[0].mxu0
      %v1365 = vadd.f32 0.0, %v1364
      %v1366 = vpop.f32.mrb[0].mxu0
      %1367 = vmatprep.mubr.bf16.mxu0 0
      %1368 = vmatmul.mubr.bf16.gmra.mrb[0].mxu0 %v869
      %v1369 = vpop.f32.mrb[0].mxu0
      %v1370 = vadd.f32 0.0, %v1369
      %v1371 = vpop.f32.mrb[0].mxu0
      %v1372 = vpop.f32.mrb[0].mxu0
      %v1373 = vadd.f32 0.0, %v1372
      %v1374 = vpop.f32.mrb[0].mxu0
      %1375 = vmatprep.mubr.bf16.mxu0 0
      %1376 = vmatmul.mubr.bf16.gmra.mrb[0].mxu0 %v872
      %v1377 = vpop.f32.mrb[0].mxu0
      %v1378 = vadd.f32 0.0, %v1377
      %v1379 = vpop.f32.mrb[0].mxu0
      %v1380 = vpop.f32.mrb[0].mxu0
      %v1381 = vadd.f32 0.0, %v1380
      %v1382 = vpop.f32.mrb[0].mxu0
      %1383 = vmatprep.mubr.bf16.mxu0 0
      %1384 = vmatmul.mubr.bf16.gmra.mrb[0].mxu0 %v875
      %v1385 = vpop.f32.mrb[0].mxu0
      %v1386 = vadd.f32 0.0, %v1385
      %v1387 = vpop.f32.mrb[0].mxu0
      %v1388 = vpop.f32.mrb[0].mxu0
      %v1389 = vadd.f32 0.0, %v1388
      %v1390 = vpop.f32.mrb[0].mxu0
      %1391 = vmatprep.mubr.bf16.mxu0 0
      %1392 = vmatmul.mubr.bf16.gmra.mrb[0].mxu0 %v878
      %v1393 = vpop.f32.mrb[0].mxu0
      %v1394 = vadd.f32 0.0, %v1393
      %v1395 = vpop.f32.mrb[0].mxu0
      %v1396 = vpop.f32.mrb[0].mxu0
      %v1397 = vadd.f32 0.0, %v1396
      %v1398 = vpop.f32.mrb[0].mxu0
      %1399 = vmatprep.mubr.bf16.mxu0 0
      %1400 = vmatmul.mubr.bf16.gmra.mrb[0].mxu0 %v881
      %v1401 = vpop.f32.mrb[0].mxu0
      %v1402 = vadd.f32 0.0, %v1401
      %v1403 = vpop.f32.mrb[0].mxu0
      %v1404 = vpop.f32.mrb[0].mxu0
      %v1405 = vadd.f32 0.0, %v1404
      %v1406 = vpop.f32.mrb[0].mxu0
      %1407 = vmatprep.mubr.bf16.mxu0 0
      %1408 = vmatmul.mubr.bf16.gmra.mrb[0].mxu0 %v884
      %v1409 = vpop.f32.mrb[0].mxu0
      %v1410 = vadd.f32 0.0, %v1409
      %v1411 = vpop.f32.mrb[0].mxu0
      %v1412 = vpop.f32.mrb[0].mxu0
      %v1413 = vadd.f32 0.0, %v1412
      %v1414 = vpop.f32.mrb[0].mxu0
      %1415 = vmatprep.mubr.bf16.mxu0 0
      %1416 = vmatmul.mubr.bf16.gmra.mrb[0].mxu0 %v887
      %v1417 = vpop.f32.mrb[0].mxu0
      %v1418 = vadd.f32 0.0, %v1417
      %v1419 = vpop.f32.mrb[0].mxu0
      %v1420 = vpop.f32.mrb[0].mxu0
      %v1421 = vadd.f32 0.0, %v1420
      %v1422 = vpop.f32.mrb[0].mxu0
      %1423 = vmatprep.mubr.bf16.mxu0 0
      %1424 = vmatmul.mubr.bf16.gmra.mrb[0].mxu0 %v890
      %v1425 = vpop.f32.mrb[0].mxu0
      %v1426 = vadd.f32 0.0, %v1425
      %v1427 = vpop.f32.mrb[0].mxu0
      %v1428 = vpop.f32.mrb[0].mxu0
      %v1429 = vadd.f32 0.0, %v1428
      %v1430 = vpop.f32.mrb[0].mxu0
      %1431 = vmatprep.mubr.bf16.mxu0 0
      %1432 = vmatmul.mubr.bf16.gmra.mrb[0].mxu0 %v893
      %v1433 = vpop.f32.mrb[0].mxu0
      %v1434 = vadd.f32 0.0, %v1433
      %v1435 = vpop.f32.mrb[0].mxu0
      %v1436 = vpop.f32.mrb[0].mxu0
      %v1437 = vadd.f32 0.0, %v1436
      %v1438 = vpop.f32.mrb[0].mxu0
      %1439 = vdwg.mxu0
      %v1440 = vld [vmem:[%s2] sm:$0x1]
      %v1442 = vlaneseq
      %v1443 = vshrl.u32 %v1442, 7
      %v1444 = vsub.s32 0, %v1443
      %v1445 = vrot.slane %v1440, %v1444
      %v1447 = vmul.f32 %v930, %v1445
      %v1448 = vmul.f32 %v933, %v1445
      %v1449 = vmul.f32 %v938, %v1445
      %v1450 = vmul.f32 %v941, %v1445
      %v1451 = vmul.f32 %v946, %v1445
      %v1452 = vmul.f32 %v949, %v1445
      %v1453 = vmul.f32 %v954, %v1445
      %v1454 = vmul.f32 %v957, %v1445
      %v1455 = vmul.f32 %v962, %v1445
      %v1456 = vmul.f32 %v965, %v1445
      %v1457 = vmul.f32 %v970, %v1445
      %v1458 = vmul.f32 %v973, %v1445
      %v1459 = vmul.f32 %v978, %v1445
      %v1460 = vmul.f32 %v981, %v1445
      %v1461 = vmul.f32 %v986, %v1445
      %v1462 = vmul.f32 %v989, %v1445
      %v1463 = vmul.f32 %v994, %v1445
      %v1464 = vmul.f32 %v997, %v1445
      %v1465 = vmul.f32 %v1002, %v1445
      %v1466 = vmul.f32 %v1005, %v1445
      %v1467 = vmul.f32 %v1010, %v1445
      %v1468 = vmul.f32 %v1013, %v1445
      %v1469 = vmul.f32 %v1018, %v1445
      %v1470 = vmul.f32 %v1021, %v1445
      %v1471 = vmul.f32 %v1026, %v1445
      %v1472 = vmul.f32 %v1029, %v1445
      %v1473 = vmul.f32 %v1034, %v1445
      %v1474 = vmul.f32 %v1037, %v1445
      %v1475 = vmul.f32 %v1042, %v1445
      %v1476 = vmul.f32 %v1045, %v1445
      %v1477 = vmul.f32 %v1050, %v1445
      %v1478 = vmul.f32 %v1053, %v1445
      %v1479 = vmul.f32 %v1058, %v1445
      %v1480 = vmul.f32 %v1061, %v1445
      %v1481 = vmul.f32 %v1066, %v1445
      %v1482 = vmul.f32 %v1069, %v1445
      %v1483 = vmul.f32 %v1074, %v1445
      %v1484 = vmul.f32 %v1077, %v1445
      %v1485 = vmul.f32 %v1082, %v1445
      %v1486 = vmul.f32 %v1085, %v1445
      %v1487 = vmul.f32 %v1090, %v1445
      %v1488 = vmul.f32 %v1093, %v1445
      %v1489 = vmul.f32 %v1098, %v1445
      %v1490 = vmul.f32 %v1101, %v1445
      %v1491 = vmul.f32 %v1106, %v1445
      %v1492 = vmul.f32 %v1109, %v1445
      %v1493 = vmul.f32 %v1114, %v1445
      %v1494 = vmul.f32 %v1117, %v1445
      %v1495 = vmul.f32 %v1122, %v1445
      %v1496 = vmul.f32 %v1125, %v1445
      %v1497 = vmul.f32 %v1130, %v1445
      %v1498 = vmul.f32 %v1133, %v1445
      %v1499 = vmul.f32 %v1138, %v1445
      %v1500 = vmul.f32 %v1141, %v1445
      %v1501 = vmul.f32 %v1146, %v1445
      %v1502 = vmul.f32 %v1149, %v1445
      %v1503 = vmul.f32 %v1154, %v1445
      %v1504 = vmul.f32 %v1157, %v1445
      %v1505 = vmul.f32 %v1162, %v1445
      %v1506 = vmul.f32 %v1165, %v1445
      %v1507 = vmul.f32 %v1170, %v1445
      %v1508 = vmul.f32 %v1173, %v1445
      %v1509 = vmul.f32 %v1178, %v1445
      %v1510 = vmul.f32 %v1181, %v1445
      %v1511 = vmul.f32 %v1186, %v1445
      %v1512 = vmul.f32 %v1189, %v1445
      %v1513 = vmul.f32 %v1194, %v1445
      %v1514 = vmul.f32 %v1197, %v1445
      %v1515 = vmul.f32 %v1202, %v1445
      %v1516 = vmul.f32 %v1205, %v1445
      %v1517 = vmul.f32 %v1210, %v1445
      %v1518 = vmul.f32 %v1213, %v1445
      %v1519 = vmul.f32 %v1218, %v1445
      %v1520 = vmul.f32 %v1221, %v1445
      %v1521 = vmul.f32 %v1226, %v1445
      %v1522 = vmul.f32 %v1229, %v1445
      %v1523 = vmul.f32 %v1234, %v1445
      %v1524 = vmul.f32 %v1237, %v1445
      %v1525 = vmul.f32 %v1242, %v1445
      %v1526 = vmul.f32 %v1245, %v1445
      %v1527 = vmul.f32 %v1250, %v1445
      %v1528 = vmul.f32 %v1253, %v1445
      %v1529 = vmul.f32 %v1258, %v1445
      %v1530 = vmul.f32 %v1261, %v1445
      %v1531 = vmul.f32 %v1266, %v1445
      %v1532 = vmul.f32 %v1269, %v1445
      %v1533 = vmul.f32 %v1274, %v1445
      %v1534 = vmul.f32 %v1277, %v1445
      %v1535 = vmul.f32 %v1282, %v1445
      %v1536 = vmul.f32 %v1285, %v1445
      %v1537 = vmul.f32 %v1290, %v1445
      %v1538 = vmul.f32 %v1293, %v1445
      %v1539 = vmul.f32 %v1298, %v1445
      %v1540 = vmul.f32 %v1301, %v1445
      %v1541 = vmul.f32 %v1306, %v1445
      %v1542 = vmul.f32 %v1309, %v1445
      %v1543 = vmul.f32 %v1314, %v1445
      %v1544 = vmul.f32 %v1317, %v1445
      %v1545 = vmul.f32 %v1322, %v1445
      %v1546 = vmul.f32 %v1325, %v1445
      %v1547 = vmul.f32 %v1330, %v1445
      %v1548 = vmul.f32 %v1333, %v1445
      %v1549 = vmul.f32 %v1338, %v1445
      %v1550 = vmul.f32 %v1341, %v1445
      %v1551 = vmul.f32 %v1346, %v1445
      %v1552 = vmul.f32 %v1349, %v1445
      %v1553 = vmul.f32 %v1354, %v1445
      %v1554 = vmul.f32 %v1357, %v1445
      %v1555 = vmul.f32 %v1362, %v1445
      %v1556 = vmul.f32 %v1365, %v1445
      %v1557 = vmul.f32 %v1370, %v1445
      %v1558 = vmul.f32 %v1373, %v1445
      %v1559 = vmul.f32 %v1378, %v1445
      %v1560 = vmul.f32 %v1381, %v1445
      %v1561 = vmul.f32 %v1386, %v1445
      %v1562 = vmul.f32 %v1389, %v1445
      %v1563 = vmul.f32 %v1394, %v1445
      %v1564 = vmul.f32 %v1397, %v1445
      %v1565 = vmul.f32 %v1402, %v1445
      %v1566 = vmul.f32 %v1405, %v1445
      %v1567 = vmul.f32 %v1410, %v1445
      %v1568 = vmul.f32 %v1413, %v1445
      %v1569 = vmul.f32 %v1418, %v1445
      %v1570 = vmul.f32 %v1421, %v1445
      %v1571 = vmul.f32 %v1426, %v1445
      %v1572 = vmul.f32 %v1429, %v1445
      %v1573 = vmul.f32 %v1434, %v1445
      %v1574 = vmul.f32 %v1437, %v1445
      %v1575 = vld [vmem:[%s3] sm:$0x1]
      %v1577 = vlaneseq
      %v1578 = vshrl.u32 %v1577, 7
      %v1579 = vsub.s32 0, %v1578
      %v1580 = vrot.slane %v1575, %v1579
      %v1582 = vadd.f32 %v1447, %v1580
      %v1583 = vadd.f32 %v1448, %v1580
      %v1584 = vadd.f32 %v1449, %v1580
      %v1585 = vadd.f32 %v1450, %v1580
      %v1586 = vadd.f32 %v1451, %v1580
      %v1587 = vadd.f32 %v1452, %v1580
      %v1588 = vadd.f32 %v1453, %v1580
      %v1589 = vadd.f32 %v1454, %v1580
      %v1590 = vadd.f32 %v1455, %v1580
      %v1591 = vadd.f32 %v1456, %v1580
      %v1592 = vadd.f32 %v1457, %v1580
      %v1593 = vadd.f32 %v1458, %v1580
      %v1594 = vadd.f32 %v1459, %v1580
      %v1595 = vadd.f32 %v1460, %v1580
      %v1596 = vadd.f32 %v1461, %v1580
      %v1597 = vadd.f32 %v1462, %v1580
      %v1598 = vadd.f32 %v1463, %v1580
      %v1599 = vadd.f32 %v1464, %v1580
      %v1600 = vadd.f32 %v1465, %v1580
      %v1601 = vadd.f32 %v1466, %v1580
      %v1602 = vadd.f32 %v1467, %v1580
      %v1603 = vadd.f32 %v1468, %v1580
      %v1604 = vadd.f32 %v1469, %v1580
      %v1605 = vadd.f32 %v1470, %v1580
      %v1606 = vadd.f32 %v1471, %v1580
      %v1607 = vadd.f32 %v1472, %v1580
      %v1608 = vadd.f32 %v1473, %v1580
      %v1609 = vadd.f32 %v1474, %v1580
      %v1610 = vadd.f32 %v1475, %v1580
      %v1611 = vadd.f32 %v1476, %v1580
      %v1612 = vadd.f32 %v1477, %v1580
      %v1613 = vadd.f32 %v1478, %v1580
      %v1614 = vadd.f32 %v1479, %v1580
      %v1615 = vadd.f32 %v1480, %v1580
      %v1616 = vadd.f32 %v1481, %v1580
      %v1617 = vadd.f32 %v1482, %v1580
      %v1618 = vadd.f32 %v1483, %v1580
      %v1619 = vadd.f32 %v1484, %v1580
      %v1620 = vadd.f32 %v1485, %v1580
      %v1621 = vadd.f32 %v1486, %v1580
      %v1622 = vadd.f32 %v1487, %v1580
      %v1623 = vadd.f32 %v1488, %v1580
      %v1624 = vadd.f32 %v1489, %v1580
      %v1625 = vadd.f32 %v1490, %v1580
      %v1626 = vadd.f32 %v1491, %v1580
      %v1627 = vadd.f32 %v1492, %v1580
      %v1628 = vadd.f32 %v1493, %v1580
      %v1629 = vadd.f32 %v1494, %v1580
      %v1630 = vadd.f32 %v1495, %v1580
      %v1631 = vadd.f32 %v1496, %v1580
      %v1632 = vadd.f32 %v1497, %v1580
      %v1633 = vadd.f32 %v1498, %v1580
      %v1634 = vadd.f32 %v1499, %v1580
      %v1635 = vadd.f32 %v1500, %v1580
      %v1636 = vadd.f32 %v1501, %v1580
      %v1637 = vadd.f32 %v1502, %v1580
      %v1638 = vadd.f32 %v1503, %v1580
      %v1639 = vadd.f32 %v1504, %v1580
      %v1640 = vadd.f32 %v1505, %v1580
      %v1641 = vadd.f32 %v1506, %v1580
      %v1642 = vadd.f32 %v1507, %v1580
      %v1643 = vadd.f32 %v1508, %v1580
      %v1644 = vadd.f32 %v1509, %v1580
      %v1645 = vadd.f32 %v1510, %v1580
      %v1646 = vadd.f32 %v1511, %v1580
      %v1647 = vadd.f32 %v1512, %v1580
      %v1648 = vadd.f32 %v1513, %v1580
      %v1649 = vadd.f32 %v1514, %v1580
      %v1650 = vadd.f32 %v1515, %v1580
      %v1651 = vadd.f32 %v1516, %v1580
      %v1652 = vadd.f32 %v1517, %v1580
      %v1653 = vadd.f32 %v1518, %v1580
      %v1654 = vadd.f32 %v1519, %v1580
      %v1655 = vadd.f32 %v1520, %v1580
      %v1656 = vadd.f32 %v1521, %v1580
      %v1657 = vadd.f32 %v1522, %v1580
      %v1658 = vadd.f32 %v1523, %v1580
      %v1659 = vadd.f32 %v1524, %v1580
      %v1660 = vadd.f32 %v1525, %v1580
      %v1661 = vadd.f32 %v1526, %v1580
      %v1662 = vadd.f32 %v1527, %v1580
      %v1663 = vadd.f32 %v1528, %v1580
      %v1664 = vadd.f32 %v1529, %v1580
      %v1665 = vadd.f32 %v1530, %v1580
      %v1666 = vadd.f32 %v1531, %v1580
      %v1667 = vadd.f32 %v1532, %v1580
      %v1668 = vadd.f32 %v1533, %v1580
      %v1669 = vadd.f32 %v1534, %v1580
      %v1670 = vadd.f32 %v1535, %v1580
      %v1671 = vadd.f32 %v1536, %v1580
      %v1672 = vadd.f32 %v1537, %v1580
      %v1673 = vadd.f32 %v1538, %v1580
      %v1674 = vadd.f32 %v1539, %v1580
      %v1675 = vadd.f32 %v1540, %v1580
      %v1676 = vadd.f32 %v1541, %v1580
      %v1677 = vadd.f32 %v1542, %v1580
      %v1678 = vadd.f32 %v1543, %v1580
      %v1679 = vadd.f32 %v1544, %v1580
      %v1680 = vadd.f32 %v1545, %v1580
      %v1681 = vadd.f32 %v1546, %v1580
      %v1682 = vadd.f32 %v1547, %v1580
      %v1683 = vadd.f32 %v1548, %v1580
      %v1684 = vadd.f32 %v1549, %v1580
      %v1685 = vadd.f32 %v1550, %v1580
      %v1686 = vadd.f32 %v1551, %v1580
      %v1687 = vadd.f32 %v1552, %v1580
      %v1688 = vadd.f32 %v1553, %v1580
      %v1689 = vadd.f32 %v1554, %v1580
      %v1690 = vadd.f32 %v1555, %v1580
      %v1691 = vadd.f32 %v1556, %v1580
      %v1692 = vadd.f32 %v1557, %v1580
      %v1693 = vadd.f32 %v1558, %v1580
      %v1694 = vadd.f32 %v1559, %v1580
      %v1695 = vadd.f32 %v1560, %v1580
      %v1696 = vadd.f32 %v1561, %v1580
      %v1697 = vadd.f32 %v1562, %v1580
      %v1698 = vadd.f32 %v1563, %v1580
      %v1699 = vadd.f32 %v1564, %v1580
      %v1700 = vadd.f32 %v1565, %v1580
      %v1701 = vadd.f32 %v1566, %v1580
      %v1702 = vadd.f32 %v1567, %v1580
      %v1703 = vadd.f32 %v1568, %v1580
      %v1704 = vadd.f32 %v1569, %v1580
      %v1705 = vadd.f32 %v1570, %v1580
      %v1706 = vadd.f32 %v1571, %v1580
      %v1707 = vadd.f32 %v1572, %v1580
      %v1708 = vadd.f32 %v1573, %v1580
      %v1709 = vadd.f32 %v1574, %v1580
      %v1710 = vmax.f32 %v1582, 0.0
      %v1711 = vmax.f32 %v1583, 0.0
      %v1712 = vmax.f32 %v1584, 0.0
      %v1713 = vmax.f32 %v1585, 0.0
      %v1714 = vmax.f32 %v1586, 0.0
      %v1715 = vmax.f32 %v1587, 0.0
      %v1716 = vmax.f32 %v1588, 0.0
      %v1717 = vmax.f32 %v1589, 0.0
      %v1718 = vmax.f32 %v1590, 0.0
      %v1719 = vmax.f32 %v1591, 0.0
      %v1720 = vmax.f32 %v1592, 0.0
      %v1721 = vmax.f32 %v1593, 0.0
      %v1722 = vmax.f32 %v1594, 0.0
      %v1723 = vmax.f32 %v1595, 0.0
      %v1724 = vmax.f32 %v1596, 0.0
      %v1725 = vmax.f32 %v1597, 0.0
      %v1726 = vmax.f32 %v1598, 0.0
      %v1727 = vmax.f32 %v1599, 0.0
      %v1728 = vmax.f32 %v1600, 0.0
      %v1729 = vmax.f32 %v1601, 0.0
      %v1730 = vmax.f32 %v1602, 0.0
      %v1731 = vmax.f32 %v1603, 0.0
      %v1732 = vmax.f32 %v1604, 0.0
      %v1733 = vmax.f32 %v1605, 0.0
      %v1734 = vmax.f32 %v1606, 0.0
      %v1735 = vmax.f32 %v1607, 0.0
      %v1736 = vmax.f32 %v1608, 0.0
      %v1737 = vmax.f32 %v1609, 0.0
      %v1738 = vmax.f32 %v1610, 0.0
      %v1739 = vmax.f32 %v1611, 0.0
      %v1740 = vmax.f32 %v1612, 0.0
      %v1741 = vmax.f32 %v1613, 0.0
      %v1742 = vmax.f32 %v1614, 0.0
      %v1743 = vmax.f32 %v1615, 0.0
      %v1744 = vmax.f32 %v1616, 0.0
      %v1745 = vmax.f32 %v1617, 0.0
      %v1746 = vmax.f32 %v1618, 0.0
      %v1747 = vmax.f32 %v1619, 0.0
      %v1748 = vmax.f32 %v1620, 0.0
      %v1749 = vmax.f32 %v1621, 0.0
      %v1750 = vmax.f32 %v1622, 0.0
      %v1751 = vmax.f32 %v1623, 0.0
      %v1752 = vmax.f32 %v1624, 0.0
      %v1753 = vmax.f32 %v1625, 0.0
      %v1754 = vmax.f32 %v1626, 0.0
      %v1755 = vmax.f32 %v1627, 0.0
      %v1756 = vmax.f32 %v1628, 0.0
      %v1757 = vmax.f32 %v1629, 0.0
      %v1758 = vmax.f32 %v1630, 0.0
      %v1759 = vmax.f32 %v1631, 0.0
      %v1760 = vmax.f32 %v1632, 0.0
      %v1761 = vmax.f32 %v1633, 0.0
      %v1762 = vmax.f32 %v1634, 0.0
      %v1763 = vmax.f32 %v1635, 0.0
      %v1764 = vmax.f32 %v1636, 0.0
      %v1765 = vmax.f32 %v1637, 0.0
      %v1766 = vmax.f32 %v1638, 0.0
      %v1767 = vmax.f32 %v1639, 0.0
      %v1768 = vmax.f32 %v1640, 0.0
      %v1769 = vmax.f32 %v1641, 0.0
      %v1770 = vmax.f32 %v1642, 0.0
      %v1771 = vmax.f32 %v1643, 0.0
      %v1772 = vmax.f32 %v1644, 0.0
      %v1773 = vmax.f32 %v1645, 0.0
      %v1774 = vmax.f32 %v1646, 0.0
      %v1775 = vmax.f32 %v1647, 0.0
      %v1776 = vmax.f32 %v1648, 0.0
      %v1777 = vmax.f32 %v1649, 0.0
      %v1778 = vmax.f32 %v1650, 0.0
      %v1779 = vmax.f32 %v1651, 0.0
      %v1780 = vmax.f32 %v1652, 0.0
      %v1781 = vmax.f32 %v1653, 0.0
      %v1782 = vmax.f32 %v1654, 0.0
      %v1783 = vmax.f32 %v1655, 0.0
      %v1784 = vmax.f32 %v1656, 0.0
      %v1785 = vmax.f32 %v1657, 0.0
      %v1786 = vmax.f32 %v1658, 0.0
      %v1787 = vmax.f32 %v1659, 0.0
      %v1788 = vmax.f32 %v1660, 0.0
      %v1789 = vmax.f32 %v1661, 0.0
      %v1790 = vmax.f32 %v1662, 0.0
      %v1791 = vmax.f32 %v1663, 0.0
      %v1792 = vmax.f32 %v1664, 0.0
      %v1793 = vmax.f32 %v1665, 0.0
      %v1794 = vmax.f32 %v1666, 0.0
      %v1795 = vmax.f32 %v1667, 0.0
      %v1796 = vmax.f32 %v1668, 0.0
      %v1797 = vmax.f32 %v1669, 0.0
      %v1798 = vmax.f32 %v1670, 0.0
      %v1799 = vmax.f32 %v1671, 0.0
      %v1800 = vmax.f32 %v1672, 0.0
      %v1801 = vmax.f32 %v1673, 0.0
      %v1802 = vmax.f32 %v1674, 0.0
      %v1803 = vmax.f32 %v1675, 0.0
      %v1804 = vmax.f32 %v1676, 0.0
      %v1805 = vmax.f32 %v1677, 0.0
      %v1806 = vmax.f32 %v1678, 0.0
      %v1807 = vmax.f32 %v1679, 0.0
      %v1808 = vmax.f32 %v1680, 0.0
      %v1809 = vmax.f32 %v1681, 0.0
      %v1810 = vmax.f32 %v1682, 0.0
      %v1811 = vmax.f32 %v1683, 0.0
      %v1812 = vmax.f32 %v1684, 0.0
      %v1813 = vmax.f32 %v1685, 0.0
      %v1814 = vmax.f32 %v1686, 0.0
      %v1815 = vmax.f32 %v1687, 0.0
      %v1816 = vmax.f32 %v1688, 0.0
      %v1817 = vmax.f32 %v1689, 0.0
      %v1818 = vmax.f32 %v1690, 0.0
      %v1819 = vmax.f32 %v1691, 0.0
      %v1820 = vmax.f32 %v1692, 0.0
      %v1821 = vmax.f32 %v1693, 0.0
      %v1822 = vmax.f32 %v1694, 0.0
      %v1823 = vmax.f32 %v1695, 0.0
      %v1824 = vmax.f32 %v1696, 0.0
      %v1825 = vmax.f32 %v1697, 0.0
      %v1826 = vmax.f32 %v1698, 0.0
      %v1827 = vmax.f32 %v1699, 0.0
      %v1828 = vmax.f32 %v1700, 0.0
      %v1829 = vmax.f32 %v1701, 0.0
      %v1830 = vmax.f32 %v1702, 0.0
      %v1831 = vmax.f32 %v1703, 0.0
      %v1832 = vmax.f32 %v1704, 0.0
      %v1833 = vmax.f32 %v1705, 0.0
      %v1834 = vmax.f32 %v1706, 0.0
      %v1835 = vmax.f32 %v1707, 0.0
      %v1836 = vmax.f32 %v1708, 0.0
      %v1837 = vmax.f32 %v1709, 0.0
      %v1838 = vpack.c.bf16 %v1711, %v1710
      %v1839 = vpack.c.bf16 %v1713, %v1712
      %v1840 = vpack.c.bf16 %v1715, %v1714
      %v1841 = vpack.c.bf16 %v1717, %v1716
      %v1842 = vpack.c.bf16 %v1719, %v1718
      %v1843 = vpack.c.bf16 %v1721, %v1720
      %v1844 = vpack.c.bf16 %v1723, %v1722
      %v1845 = vpack.c.bf16 %v1725, %v1724
      %v1846 = vpack.c.bf16 %v1727, %v1726
      %v1847 = vpack.c.bf16 %v1729, %v1728
      %v1848 = vpack.c.bf16 %v1731, %v1730
      %v1849 = vpack.c.bf16 %v1733, %v1732
      %v1850 = vpack.c.bf16 %v1735, %v1734
      %v1851 = vpack.c.bf16 %v1737, %v1736
      %v1852 = vpack.c.bf16 %v1739, %v1738
      %v1853 = vpack.c.bf16 %v1741, %v1740
      %v1854 = vpack.c.bf16 %v1743, %v1742
      %v1855 = vpack.c.bf16 %v1745, %v1744
      %v1856 = vpack.c.bf16 %v1747, %v1746
      %v1857 = vpack.c.bf16 %v1749, %v1748
      %v1858 = vpack.c.bf16 %v1751, %v1750
      %v1859 = vpack.c.bf16 %v1753, %v1752
      %v1860 = vpack.c.bf16 %v1755, %v1754
      %v1861 = vpack.c.bf16 %v1757, %v1756
      %v1862 = vpack.c.bf16 %v1759, %v1758
      %v1863 = vpack.c.bf16 %v1761, %v1760
      %v1864 = vpack.c.bf16 %v1763, %v1762
      %v1865 = vpack.c.bf16 %v1765, %v1764
      %v1866 = vpack.c.bf16 %v1767, %v1766
      %v1867 = vpack.c.bf16 %v1769, %v1768
      %v1868 = vpack.c.bf16 %v1771, %v1770
      %v1869 = vpack.c.bf16 %v1773, %v1772
      %v1870 = vpack.c.bf16 %v1775, %v1774
      %v1871 = vpack.c.bf16 %v1777, %v1776
      %v1872 = vpack.c.bf16 %v1779, %v1778
      %v1873 = vpack.c.bf16 %v1781, %v1780
      %v1874 = vpack.c.bf16 %v1783, %v1782
      %v1875 = vpack.c.bf16 %v1785, %v1784
      %v1876 = vpack.c.bf16 %v1787, %v1786
      %v1877 = vpack.c.bf16 %v1789, %v1788
      %v1878 = vpack.c.bf16 %v1791, %v1790
      %v1879 = vpack.c.bf16 %v1793, %v1792
      %v1880 = vpack.c.bf16 %v1795, %v1794
      %v1881 = vpack.c.bf16 %v1797, %v1796
      %v1882 = vpack.c.bf16 %v1799, %v1798
      %v1883 = vpack.c.bf16 %v1801, %v1800
      %v1884 = vpack.c.bf16 %v1803, %v1802
      %v1885 = vpack.c.bf16 %v1805, %v1804
      %v1886 = vpack.c.bf16 %v1807, %v1806
      %v1887 = vpack.c.bf16 %v1809, %v1808
      %v1888 = vpack.c.bf16 %v1811, %v1810
      %v1889 = vpack.c.bf16 %v1813, %v1812
      %v1890 = vpack.c.bf16 %v1815, %v1814
      %v1891 = vpack.c.bf16 %v1817, %v1816
      %v1892 = vpack.c.bf16 %v1819, %v1818
      %v1893 = vpack.c.bf16 %v1821, %v1820
      %v1894 = vpack.c.bf16 %v1823, %v1822
      %v1895 = vpack.c.bf16 %v1825, %v1824
      %v1896 = vpack.c.bf16 %v1827, %v1826
      %v1897 = vpack.c.bf16 %v1829, %v1828
      %v1898 = vpack.c.bf16 %v1831, %v1830
      %v1899 = vpack.c.bf16 %v1833, %v1832
      %v1900 = vpack.c.bf16 %v1835, %v1834
      %v1901 = vpack.c.bf16 %v1837, %v1836
      %v1966 = vunpack.c.l.b16 %v1838
      %v1967 = vunpack.c.h.b16 %v1838
      %v1968 = vunpack.c.l.b16 %v1839
      %v1969 = vunpack.c.h.b16 %v1839
      %v1970 = vunpack.c.l.b16 %v1840
      %v1971 = vunpack.c.h.b16 %v1840
      %v1972 = vunpack.c.l.b16 %v1841
      %v1973 = vunpack.c.h.b16 %v1841
      %v1974 = vunpack.c.l.b16 %v1842
      %v1975 = vunpack.c.h.b16 %v1842
      %v1976 = vunpack.c.l.b16 %v1843
      %v1977 = vunpack.c.h.b16 %v1843
      %v1978 = vunpack.c.l.b16 %v1844
      %v1979 = vunpack.c.h.b16 %v1844
      %v1980 = vunpack.c.l.b16 %v1845
      %v1981 = vunpack.c.h.b16 %v1845
      %v1982 = vunpack.c.l.b16 %v1846
      %v1983 = vunpack.c.h.b16 %v1846
      %v1984 = vunpack.c.l.b16 %v1847
      %v1985 = vunpack.c.h.b16 %v1847
      %v1986 = vunpack.c.l.b16 %v1848
      %v1987 = vunpack.c.h.b16 %v1848
      %v1988 = vunpack.c.l.b16 %v1849
      %v1989 = vunpack.c.h.b16 %v1849
      %v1990 = vunpack.c.l.b16 %v1850
      %v1991 = vunpack.c.h.b16 %v1850
      %v1992 = vunpack.c.l.b16 %v1851
      %v1993 = vunpack.c.h.b16 %v1851
      %v1994 = vunpack.c.l.b16 %v1852
      %v1995 = vunpack.c.h.b16 %v1852
      %v1996 = vunpack.c.l.b16 %v1853
      %v1997 = vunpack.c.h.b16 %v1853
      %v1998 = vunpack.c.l.b16 %v1854
      %v1999 = vunpack.c.h.b16 %v1854
      %v2000 = vunpack.c.l.b16 %v1855
      %v2001 = vunpack.c.h.b16 %v1855
      %v2002 = vunpack.c.l.b16 %v1856
      %v2003 = vunpack.c.h.b16 %v1856
      %v2004 = vunpack.c.l.b16 %v1857
      %v2005 = vunpack.c.h.b16 %v1857
      %v2006 = vunpack.c.l.b16 %v1858
      %v2007 = vunpack.c.h.b16 %v1858
      %v2008 = vunpack.c.l.b16 %v1859
      %v2009 = vunpack.c.h.b16 %v1859
      %v2010 = vunpack.c.l.b16 %v1860
      %v2011 = vunpack.c.h.b16 %v1860
      %v2012 = vunpack.c.l.b16 %v1861
      %v2013 = vunpack.c.h.b16 %v1861
      %v2014 = vunpack.c.l.b16 %v1862
      %v2015 = vunpack.c.h.b16 %v1862
      %v2016 = vunpack.c.l.b16 %v1863
      %v2017 = vunpack.c.h.b16 %v1863
      %v2018 = vunpack.c.l.b16 %v1864
      %v2019 = vunpack.c.h.b16 %v1864
      %v2020 = vunpack.c.l.b16 %v1865
      %v2021 = vunpack.c.h.b16 %v1865
      %v2022 = vunpack.c.l.b16 %v1866
      %v2023 = vunpack.c.h.b16 %v1866
      %v2024 = vunpack.c.l.b16 %v1867
      %v2025 = vunpack.c.h.b16 %v1867
      %v2026 = vunpack.c.l.b16 %v1868
      %v2027 = vunpack.c.h.b16 %v1868
      %v2028 = vunpack.c.l.b16 %v1869
      %v2029 = vunpack.c.h.b16 %v1869
      %v2030 = vunpack.c.l.b16 %v1870
      %v2031 = vunpack.c.h.b16 %v1870
      %v2032 = vunpack.c.l.b16 %v1871
      %v2033 = vunpack.c.h.b16 %v1871
      %v2034 = vunpack.c.l.b16 %v1872
      %v2035 = vunpack.c.h.b16 %v1872
      %v2036 = vunpack.c.l.b16 %v1873
      %v2037 = vunpack.c.h.b16 %v1873
      %v2038 = vunpack.c.l.b16 %v1874
      %v2039 = vunpack.c.h.b16 %v1874
      %v2040 = vunpack.c.l.b16 %v1875
      %v2041 = vunpack.c.h.b16 %v1875
      %v2042 = vunpack.c.l.b16 %v1876
      %v2043 = vunpack.c.h.b16 %v1876
      %v2044 = vunpack.c.l.b16 %v1877
      %v2045 = vunpack.c.h.b16 %v1877
      %v2046 = vunpack.c.l.b16 %v1878
      %v2047 = vunpack.c.h.b16 %v1878
      %v2048 = vunpack.c.l.b16 %v1879
      %v2049 = vunpack.c.h.b16 %v1879
      %v2050 = vunpack.c.l.b16 %v1880
      %v2051 = vunpack.c.h.b16 %v1880
      %v2052 = vunpack.c.l.b16 %v1881
      %v2053 = vunpack.c.h.b16 %v1881
      %v2054 = vunpack.c.l.b16 %v1882
      %v2055 = vunpack.c.h.b16 %v1882
      %v2056 = vunpack.c.l.b16 %v1883
      %v2057 = vunpack.c.h.b16 %v1883
      %v2058 = vunpack.c.l.b16 %v1884
      %v2059 = vunpack.c.h.b16 %v1884
      %v2060 = vunpack.c.l.b16 %v1885
      %v2061 = vunpack.c.h.b16 %v1885
      %v2062 = vunpack.c.l.b16 %v1886
      %v2063 = vunpack.c.h.b16 %v1886
      %v2064 = vunpack.c.l.b16 %v1887
      %v2065 = vunpack.c.h.b16 %v1887
      %v2066 = vunpack.c.l.b16 %v1888
      %v2067 = vunpack.c.h.b16 %v1888
      %v2068 = vunpack.c.l.b16 %v1889
      %v2069 = vunpack.c.h.b16 %v1889
      %v2070 = vunpack.c.l.b16 %v1890
      %v2071 = vunpack.c.h.b16 %v1890
      %v2072 = vunpack.c.l.b16 %v1891
      %v2073 = vunpack.c.h.b16 %v1891
      %v2074 = vunpack.c.l.b16 %v1892
      %v2075 = vunpack.c.h.b16 %v1892
      %v2076 = vunpack.c.l.b16 %v1893
      %v2077 = vunpack.c.h.b16 %v1893
      %v2078 = vunpack.c.l.b16 %v1894
      %v2079 = vunpack.c.h.b16 %v1894
      %v2080 = vunpack.c.l.b16 %v1895
      %v2081 = vunpack.c.h.b16 %v1895
      %v2082 = vunpack.c.l.b16 %v1896
      %v2083 = vunpack.c.h.b16 %v1896
      %v2084 = vunpack.c.l.b16 %v1897
      %v2085 = vunpack.c.h.b16 %v1897
      %v2086 = vunpack.c.l.b16 %v1898
      %v2087 = vunpack.c.h.b16 %v1898
      %v2088 = vunpack.c.l.b16 %v1899
      %v2089 = vunpack.c.h.b16 %v1899
      %v2090 = vunpack.c.l.b16 %v1900
      %v2091 = vunpack.c.h.b16 %v1900
      %v2092 = vunpack.c.l.b16 %v1901
      %v2093 = vunpack.c.h.b16 %v1901
      %v2094 = vpack.c.b16 %v1966, %v1966
      %v2095 = vpack.c.b16 %v1967, %v1967
      %v2096 = vpack.c.b16 %v1968, %v1968
      %v2097 = vpack.c.b16 %v1969, %v1969
      %v2098 = vpack.c.b16 %v1970, %v1970
      %v2099 = vpack.c.b16 %v1971, %v1971
      %v2100 = vpack.c.b16 %v1972, %v1972
      %v2101 = vpack.c.b16 %v1973, %v1973
      %v2102 = vpack.c.b16 %v1974, %v1974
      %v2103 = vpack.c.b16 %v1975, %v1975
      %v2104 = vpack.c.b16 %v1976, %v1976
      %v2105 = vpack.c.b16 %v1977, %v1977
      %v2106 = vpack.c.b16 %v1978, %v1978
      %v2107 = vpack.c.b16 %v1979, %v1979
      %v2108 = vpack.c.b16 %v1980, %v1980
      %v2109 = vpack.c.b16 %v1981, %v1981
      %v2110 = vpack.c.b16 %v1982, %v1982
      %v2111 = vpack.c.b16 %v1983, %v1983
      %v2112 = vpack.c.b16 %v1984, %v1984
      %v2113 = vpack.c.b16 %v1985, %v1985
      %v2114 = vpack.c.b16 %v1986, %v1986
      %v2115 = vpack.c.b16 %v1987, %v1987
      %v2116 = vpack.c.b16 %v1988, %v1988
      %v2117 = vpack.c.b16 %v1989, %v1989
      %v2118 = vpack.c.b16 %v1990, %v1990
      %v2119 = vpack.c.b16 %v1991, %v1991
      %v2120 = vpack.c.b16 %v1992, %v1992
      %v2121 = vpack.c.b16 %v1993, %v1993
      %v2122 = vpack.c.b16 %v1994, %v1994
      %v2123 = vpack.c.b16 %v1995, %v1995
      %v2124 = vpack.c.b16 %v1996, %v1996
      %v2125 = vpack.c.b16 %v1997, %v1997
      %v2126 = vpack.c.b16 %v1998, %v1998
      %v2127 = vpack.c.b16 %v1999, %v1999
      %v2128 = vpack.c.b16 %v2000, %v2000
      %v2129 = vpack.c.b16 %v2001, %v2001
      %v2130 = vpack.c.b16 %v2002, %v2002
      %v2131 = vpack.c.b16 %v2003, %v2003
      %v2132 = vpack.c.b16 %v2004, %v2004
      %v2133 = vpack.c.b16 %v2005, %v2005
      %v2134 = vpack.c.b16 %v2006, %v2006
      %v2135 = vpack.c.b16 %v2007, %v2007
      %v2136 = vpack.c.b16 %v2008, %v2008
      %v2137 = vpack.c.b16 %v2009, %v2009
      %v2138 = vpack.c.b16 %v2010, %v2010
      %v2139 = vpack.c.b16 %v2011, %v2011
      %v2140 = vpack.c.b16 %v2012, %v2012
      %v2141 = vpack.c.b16 %v2013, %v2013
      %v2142 = vpack.c.b16 %v2014, %v2014
      %v2143 = vpack.c.b16 %v2015, %v2015
      %v2144 = vpack.c.b16 %v2016, %v2016
      %v2145 = vpack.c.b16 %v2017, %v2017
      %v2146 = vpack.c.b16 %v2018, %v2018
      %v2147 = vpack.c.b16 %v2019, %v2019
      %v2148 = vpack.c.b16 %v2020, %v2020
      %v2149 = vpack.c.b16 %v2021, %v2021
      %v2150 = vpack.c.b16 %v2022, %v2022
      %v2151 = vpack.c.b16 %v2023, %v2023
      %v2152 = vpack.c.b16 %v2024, %v2024
      %v2153 = vpack.c.b16 %v2025, %v2025
      %v2154 = vpack.c.b16 %v2026, %v2026
      %v2155 = vpack.c.b16 %v2027, %v2027
      %v2156 = vpack.c.b16 %v2028, %v2028
      %v2157 = vpack.c.b16 %v2029, %v2029
      %v2158 = vpack.c.b16 %v2030, %v2030
      %v2159 = vpack.c.b16 %v2031, %v2031
      %v2160 = vpack.c.b16 %v2032, %v2032
      %v2161 = vpack.c.b16 %v2033, %v2033
      %v2162 = vpack.c.b16 %v2034, %v2034
      %v2163 = vpack.c.b16 %v2035, %v2035
      %v2164 = vpack.c.b16 %v2036, %v2036
      %v2165 = vpack.c.b16 %v2037, %v2037
      %v2166 = vpack.c.b16 %v2038, %v2038
      %v2167 = vpack.c.b16 %v2039, %v2039
      %v2168 = vpack.c.b16 %v2040, %v2040
      %v2169 = vpack.c.b16 %v2041, %v2041
      %v2170 = vpack.c.b16 %v2042, %v2042
      %v2171 = vpack.c.b16 %v2043, %v2043
      %v2172 = vpack.c.b16 %v2044, %v2044
      %v2173 = vpack.c.b16 %v2045, %v2045
      %v2174 = vpack.c.b16 %v2046, %v2046
      %v2175 = vpack.c.b16 %v2047, %v2047
      %v2176 = vpack.c.b16 %v2048, %v2048
      %v2177 = vpack.c.b16 %v2049, %v2049
      %v2178 = vpack.c.b16 %v2050, %v2050
      %v2179 = vpack.c.b16 %v2051, %v2051
      %v2180 = vpack.c.b16 %v2052, %v2052
      %v2181 = vpack.c.b16 %v2053, %v2053
      %v2182 = vpack.c.b16 %v2054, %v2054
      %v2183 = vpack.c.b16 %v2055, %v2055
      %v2184 = vpack.c.b16 %v2056, %v2056
      %v2185 = vpack.c.b16 %v2057, %v2057
      %v2186 = vpack.c.b16 %v2058, %v2058
      %v2187 = vpack.c.b16 %v2059, %v2059
      %v2188 = vpack.c.b16 %v2060, %v2060
      %v2189 = vpack.c.b16 %v2061, %v2061
      %v2190 = vpack.c.b16 %v2062, %v2062
      %v2191 = vpack.c.b16 %v2063, %v2063
      %v2192 = vpack.c.b16 %v2064, %v2064
      %v2193 = vpack.c.b16 %v2065, %v2065
      %v2194 = vpack.c.b16 %v2066, %v2066
      %v2195 = vpack.c.b16 %v2067, %v2067
      %v2196 = vpack.c.b16 %v2068, %v2068
      %v2197 = vpack.c.b16 %v2069, %v2069
      %v2198 = vpack.c.b16 %v2070, %v2070
      %v2199 = vpack.c.b16 %v2071, %v2071
      %v2200 = vpack.c.b16 %v2072, %v2072
      %v2201 = vpack.c.b16 %v2073, %v2073
      %v2202 = vpack.c.b16 %v2074, %v2074
      %v2203 = vpack.c.b16 %v2075, %v2075
      %v2204 = vpack.c.b16 %v2076, %v2076
      %v2205 = vpack.c.b16 %v2077, %v2077
      %v2206 = vpack.c.b16 %v2078, %v2078
      %v2207 = vpack.c.b16 %v2079, %v2079
      %v2208 = vpack.c.b16 %v2080, %v2080
      %v2209 = vpack.c.b16 %v2081, %v2081
      %v2210 = vpack.c.b16 %v2082, %v2082
      %v2211 = vpack.c.b16 %v2083, %v2083
      %v2212 = vpack.c.b16 %v2084, %v2084
      %v2213 = vpack.c.b16 %v2085, %v2085
      %v2214 = vpack.c.b16 %v2086, %v2086
      %v2215 = vpack.c.b16 %v2087, %v2087
      %v2216 = vpack.c.b16 %v2088, %v2088
      %v2217 = vpack.c.b16 %v2089, %v2089
      %v2218 = vpack.c.b16 %v2090, %v2090
      %v2219 = vpack.c.b16 %v2091, %v2091
      %v2220 = vpack.c.b16 %v2092, %v2092
      %v2221 = vpack.c.b16 %v2093, %v2093
      %vm2350 = vcmask 519168
      %2351 = vst.msk [vmem:[%s235] sm:$0xf] %vm2350, %v2094
      %2352 = vst.msk [vmem:[%s235 + $0x4] sm:$0xf] %vm2350, %v2095
      %2353 = vst.msk [vmem:[%s235 + $0x8] sm:$0xf] %vm2350, %v2096
      %2354 = vst.msk [vmem:[%s235 + $0xc] sm:$0xf] %vm2350, %v2097
      %2355 = vst.msk [vmem:[%s235 + $0x10] sm:$0xf] %vm2350, %v2098
      %2356 = vst.msk [vmem:[%s235 + $0x14] sm:$0xf] %vm2350, %v2099
      %2357 = vst.msk [vmem:[%s235 + $0x18] sm:$0xf] %vm2350, %v2100
      %2358 = vst.msk [vmem:[%s235 + $0x1c] sm:$0xf] %vm2350, %v2101
      %2359 = vst.msk [vmem:[%s235 + $0x20] sm:$0xf] %vm2350, %v2102
      %2360 = vst.msk [vmem:[%s235 + $0x24] sm:$0xf] %vm2350, %v2103
      %2361 = vst.msk [vmem:[%s235 + $0x28] sm:$0xf] %vm2350, %v2104
      %2362 = vst.msk [vmem:[%s235 + $0x2c] sm:$0xf] %vm2350, %v2105
      %2363 = vst.msk [vmem:[%s235 + $0x30] sm:$0xf] %vm2350, %v2106
      %2364 = vst.msk [vmem:[%s235 + $0x34] sm:$0xf] %vm2350, %v2107
      %2365 = vst.msk [vmem:[%s235 + $0x38] sm:$0xf] %vm2350, %v2108
      %2366 = vst.msk [vmem:[%s235 + $0x3c] sm:$0xf] %vm2350, %v2109
      %2367 = vst.msk [vmem:[%s235 + $0x40] sm:$0xf] %vm2350, %v2110
      %2368 = vst.msk [vmem:[%s235 + $0x44] sm:$0xf] %vm2350, %v2111
      %2369 = vst.msk [vmem:[%s235 + $0x48] sm:$0xf] %vm2350, %v2112
      %2370 = vst.msk [vmem:[%s235 + $0x4c] sm:$0xf] %vm2350, %v2113
      %2371 = vst.msk [vmem:[%s235 + $0x50] sm:$0xf] %vm2350, %v2114
      %2372 = vst.msk [vmem:[%s235 + $0x54] sm:$0xf] %vm2350, %v2115
      %2373 = vst.msk [vmem:[%s235 + $0x58] sm:$0xf] %vm2350, %v2116
      %2374 = vst.msk [vmem:[%s235 + $0x5c] sm:$0xf] %vm2350, %v2117
      %2375 = vst.msk [vmem:[%s235 + $0x60] sm:$0xf] %vm2350, %v2118
      %2376 = vst.msk [vmem:[%s235 + $0x64] sm:$0xf] %vm2350, %v2119
      %2377 = vst.msk [vmem:[%s235 + $0x68] sm:$0xf] %vm2350, %v2120
      %2378 = vst.msk [vmem:[%s235 + $0x6c] sm:$0xf] %vm2350, %v2121
      %2379 = vst.msk [vmem:[%s235 + $0x70] sm:$0xf] %vm2350, %v2122
      %2380 = vst.msk [vmem:[%s235 + $0x74] sm:$0xf] %vm2350, %v2123
      %2381 = vst.msk [vmem:[%s235 + $0x78] sm:$0xf] %vm2350, %v2124
      %2382 = vst.msk [vmem:[%s235 + $0x7c] sm:$0xf] %vm2350, %v2125
      %2383 = vst.msk [vmem:[%s235 + $0x80] sm:$0xf] %vm2350, %v2126
      %2384 = vst.msk [vmem:[%s235 + $0x84] sm:$0xf] %vm2350, %v2127
      %2385 = vst.msk [vmem:[%s235 + $0x88] sm:$0xf] %vm2350, %v2128
      %2386 = vst.msk [vmem:[%s235 + $0x8c] sm:$0xf] %vm2350, %v2129
      %2387 = vst.msk [vmem:[%s235 + $0x90] sm:$0xf] %vm2350, %v2130
      %2388 = vst.msk [vmem:[%s235 + $0x94] sm:$0xf] %vm2350, %v2131
      %2389 = vst.msk [vmem:[%s235 + $0x98] sm:$0xf] %vm2350, %v2132
      %2390 = vst.msk [vmem:[%s235 + $0x9c] sm:$0xf] %vm2350, %v2133
      %2391 = vst.msk [vmem:[%s235 + $0xa0] sm:$0xf] %vm2350, %v2134
      %2392 = vst.msk [vmem:[%s235 + $0xa4] sm:$0xf] %vm2350, %v2135
      %2393 = vst.msk [vmem:[%s235 + $0xa8] sm:$0xf] %vm2350, %v2136
      %2394 = vst.msk [vmem:[%s235 + $0xac] sm:$0xf] %vm2350, %v2137
      %2395 = vst.msk [vmem:[%s235 + $0xb0] sm:$0xf] %vm2350, %v2138
      %2396 = vst.msk [vmem:[%s235 + $0xb4] sm:$0xf] %vm2350, %v2139
      %2397 = vst.msk [vmem:[%s235 + $0xb8] sm:$0xf] %vm2350, %v2140
      %2398 = vst.msk [vmem:[%s235 + $0xbc] sm:$0xf] %vm2350, %v2141
      %2399 = vst.msk [vmem:[%s235 + $0xc0] sm:$0xf] %vm2350, %v2142
      %2400 = vst.msk [vmem:[%s235 + $0xc4] sm:$0xf] %vm2350, %v2143
      %2401 = vst.msk [vmem:[%s235 + $0xc8] sm:$0xf] %vm2350, %v2144
      %2402 = vst.msk [vmem:[%s235 + $0xcc] sm:$0xf] %vm2350, %v2145
      %2403 = vst.msk [vmem:[%s235 + $0xd0] sm:$0xf] %vm2350, %v2146
      %2404 = vst.msk [vmem:[%s235 + $0xd4] sm:$0xf] %vm2350, %v2147
      %2405 = vst.msk [vmem:[%s235 + $0xd8] sm:$0xf] %vm2350, %v2148
      %2406 = vst.msk [vmem:[%s235 + $0xdc] sm:$0xf] %vm2350, %v2149
      %2407 = vst.msk [vmem:[%s235 + $0xe0] sm:$0xf] %vm2350, %v2150
      %2408 = vst.msk [vmem:[%s235 + $0xe4] sm:$0xf] %vm2350, %v2151
      %2409 = vst.msk [vmem:[%s235 + $0xe8] sm:$0xf] %vm2350, %v2152
      %2410 = vst.msk [vmem:[%s235 + $0xec] sm:$0xf] %vm2350, %v2153
      %2411 = vst.msk [vmem:[%s235 + $0xf0] sm:$0xf] %vm2350, %v2154
      %2412 = vst.msk [vmem:[%s235 + $0xf4] sm:$0xf] %vm2350, %v2155
      %2413 = vst.msk [vmem:[%s235 + $0xf8] sm:$0xf] %vm2350, %v2156
      %2414 = vst.msk [vmem:[%s235 + $0xfc] sm:$0xf] %vm2350, %v2157
      %2415 = vst.msk [vmem:[%s235 + $0x100] sm:$0xf] %vm2350, %v2158
      %2416 = vst.msk [vmem:[%s235 + $0x104] sm:$0xf] %vm2350, %v2159
      %2417 = vst.msk [vmem:[%s235 + $0x108] sm:$0xf] %vm2350, %v2160
      %2418 = vst.msk [vmem:[%s235 + $0x10c] sm:$0xf] %vm2350, %v2161
      %2419 = vst.msk [vmem:[%s235 + $0x110] sm:$0xf] %vm2350, %v2162
      %2420 = vst.msk [vmem:[%s235 + $0x114] sm:$0xf] %vm2350, %v2163
      %2421 = vst.msk [vmem:[%s235 + $0x118] sm:$0xf] %vm2350, %v2164
      %2422 = vst.msk [vmem:[%s235 + $0x11c] sm:$0xf] %vm2350, %v2165
      %2423 = vst.msk [vmem:[%s235 + $0x120] sm:$0xf] %vm2350, %v2166
      %2424 = vst.msk [vmem:[%s235 + $0x124] sm:$0xf] %vm2350, %v2167
      %2425 = vst.msk [vmem:[%s235 + $0x128] sm:$0xf] %vm2350, %v2168
      %2426 = vst.msk [vmem:[%s235 + $0x12c] sm:$0xf] %vm2350, %v2169
      %2427 = vst.msk [vmem:[%s235 + $0x130] sm:$0xf] %vm2350, %v2170
      %2428 = vst.msk [vmem:[%s235 + $0x134] sm:$0xf] %vm2350, %v2171
      %2429 = vst.msk [vmem:[%s235 + $0x138] sm:$0xf] %vm2350, %v2172
      %2430 = vst.msk [vmem:[%s235 + $0x13c] sm:$0xf] %vm2350, %v2173
      %2431 = vst.msk [vmem:[%s235 + $0x140] sm:$0xf] %vm2350, %v2174
      %2432 = vst.msk [vmem:[%s235 + $0x144] sm:$0xf] %vm2350, %v2175
      %2433 = vst.msk [vmem:[%s235 + $0x148] sm:$0xf] %vm2350, %v2176
      %2434 = vst.msk [vmem:[%s235 + $0x14c] sm:$0xf] %vm2350, %v2177
      %2435 = vst.msk [vmem:[%s235 + $0x150] sm:$0xf] %vm2350, %v2178
      %2436 = vst.msk [vmem:[%s235 + $0x154] sm:$0xf] %vm2350, %v2179
      %2437 = vst.msk [vmem:[%s235 + $0x158] sm:$0xf] %vm2350, %v2180
      %2438 = vst.msk [vmem:[%s235 + $0x15c] sm:$0xf] %vm2350, %v2181
      %2439 = vst.msk [vmem:[%s235 + $0x160] sm:$0xf] %vm2350, %v2182
      %2440 = vst.msk [vmem:[%s235 + $0x164] sm:$0xf] %vm2350, %v2183
      %2441 = vst.msk [vmem:[%s235 + $0x168] sm:$0xf] %vm2350, %v2184
      %2442 = vst.msk [vmem:[%s235 + $0x16c] sm:$0xf] %vm2350, %v2185
      %2443 = vst.msk [vmem:[%s235 + $0x170] sm:$0xf] %vm2350, %v2186
      %2444 = vst.msk [vmem:[%s235 + $0x174] sm:$0xf] %vm2350, %v2187
      %2445 = vst.msk [vmem:[%s235 + $0x178] sm:$0xf] %vm2350, %v2188
      %2446 = vst.msk [vmem:[%s235 + $0x17c] sm:$0xf] %vm2350, %v2189
      %2447 = vst.msk [vmem:[%s235 + $0x180] sm:$0xf] %vm2350, %v2190
      %2448 = vst.msk [vmem:[%s235 + $0x184] sm:$0xf] %vm2350, %v2191
      %2449 = vst.msk [vmem:[%s235 + $0x188] sm:$0xf] %vm2350, %v2192
      %2450 = vst.msk [vmem:[%s235 + $0x18c] sm:$0xf] %vm2350, %v2193
      %2451 = vst.msk [vmem:[%s235 + $0x190] sm:$0xf] %vm2350, %v2194
      %2452 = vst.msk [vmem:[%s235 + $0x194] sm:$0xf] %vm2350, %v2195
      %2453 = vst.msk [vmem:[%s235 + $0x198] sm:$0xf] %vm2350, %v2196
      %2454 = vst.msk [vmem:[%s235 + $0x19c] sm:$0xf] %vm2350, %v2197
      %2455 = vst.msk [vmem:[%s235 + $0x1a0] sm:$0xf] %vm2350, %v2198
      %2456 = vst.msk [vmem:[%s235 + $0x1a4] sm:$0xf] %vm2350, %v2199
      %2457 = vst.msk [vmem:[%s235 + $0x1a8] sm:$0xf] %vm2350, %v2200
      %2458 = vst.msk [vmem:[%s235 + $0x1ac] sm:$0xf] %vm2350, %v2201
      %2459 = vst.msk [vmem:[%s235 + $0x1b0] sm:$0xf] %vm2350, %v2202
      %2460 = vst.msk [vmem:[%s235 + $0x1b4] sm:$0xf] %vm2350, %v2203
      %2461 = vst.msk [vmem:[%s235 + $0x1b8] sm:$0xf] %vm2350, %v2204
      %2462 = vst.msk [vmem:[%s235 + $0x1bc] sm:$0xf] %vm2350, %v2205
      %2463 = vst.msk [vmem:[%s235 + $0x1c0] sm:$0xf] %vm2350, %v2206
      %2464 = vst.msk [vmem:[%s235 + $0x1c4] sm:$0xf] %vm2350, %v2207
      %2465 = vst.msk [vmem:[%s235 + $0x1c8] sm:$0xf] %vm2350, %v2208
      %2466 = vst.msk [vmem:[%s235 + $0x1cc] sm:$0xf] %vm2350, %v2209
      %2467 = vst.msk [vmem:[%s235 + $0x1d0] sm:$0xf] %vm2350, %v2210
      %2468 = vst.msk [vmem:[%s235 + $0x1d4] sm:$0xf] %vm2350, %v2211
      %2469 = vst.msk [vmem:[%s235 + $0x1d8] sm:$0xf] %vm2350, %v2212
      %2470 = vst.msk [vmem:[%s235 + $0x1dc] sm:$0xf] %vm2350, %v2213
      %2471 = vst.msk [vmem:[%s235 + $0x1e0] sm:$0xf] %vm2350, %v2214
      %2472 = vst.msk [vmem:[%s235 + $0x1e4] sm:$0xf] %vm2350, %v2215
      %2473 = vst.msk [vmem:[%s235 + $0x1e8] sm:$0xf] %vm2350, %v2216
      %2474 = vst.msk [vmem:[%s235 + $0x1ec] sm:$0xf] %vm2350, %v2217
      %2475 = vst.msk [vmem:[%s235 + $0x1f0] sm:$0xf] %vm2350, %v2218
      %2476 = vst.msk [vmem:[%s235 + $0x1f4] sm:$0xf] %vm2350, %v2219
      %2477 = vst.msk [vmem:[%s235 + $0x1f8] sm:$0xf] %vm2350, %v2220
      %2478 = vst.msk [vmem:[%s235 + $0x1fc] sm:$0xf] %vm2350, %v2221
      %s2479 = smul.u32 128, %s20
      %p2480 = scmp.lt.s32.totalorder %s19, 1
      %s2481 = scalar_select %p2480, %s19, 1
      %p2482 = scmp.lt.s32.totalorder %s2479, 127
      %s2483 = scalar_select %p2482, %s2479, 127
      %s2484 = smul.addr %s2481, 128
      %s2485 = sadd.s32 %s2483, %s2484
      %s2486 = smul.addr %s2485, 4
      %s2487 = scalar_lea.vmem %s4, %s2486
      // Predicated region
      $region37: #{tpu_custom_call.1} parent=35 // pred_check
        %p2488 = pneg %p138
      $region38: #{tpu_custom_call.1} parent=35 // pred_check_branch
        %2490 = sbr.rel (%p2488) target = $region40
      $region39: #{tpu_custom_call.1} parent=35 // pred_region
        %s2491 = smul.u32 128, %s20
      $region40: #{tpu_custom_call.1} parent=35 // pred_fallthru
        _
    $region36: #{tpu_custom_call.1} parent=5 // pred_fallthru
      _
    %p2492 = scmp.le.s32.totalorder 2, %s10
    // Predicated region
    $region41: #{tpu_custom_call.1} parent=5 // pred_check
      %p2493 = pneg %p2492
    $region42: #{tpu_custom_call.1} parent=5 // pred_check_branch
      %2495 = sbr.rel (%p2493) target = $region44
    $region43: #{tpu_custom_call.1} parent=5 // pred_region
      %s2496 = ssub.s32 %s10, 2
      // Predicated region
      $region45: #{tpu_custom_call.1} parent=43 // pred_check
        %p2497 = pneg %p144
      $region46: #{tpu_custom_call.1} parent=43 // pred_check_branch
        %2499 = sbr.rel (%p2497) target = $region48
      $region47: #{tpu_custom_call.1} parent=43 // pred_region
        %s2500 = smul.u32 128, %s22
        %p2501 = scmp.lt.s32.totalorder %s21, 1
        %s2502 = scalar_select %p2501, %s21, 1
        %p2503 = scmp.lt.s32.totalorder %s2500, 127
        %s2504 = scalar_select %p2503, %s2500, 127
        %s2505 = smul.addr %s2502, 128
        %s2506 = sadd.s32 %s2504, %s2505
        %s2507 = smul.addr %s2506, 4
        %s2508 = scalar_lea.vmem %s4, %s2507
      $region48: #{tpu_custom_call.1} parent=43 // pred_fallthru
        _
    $region44: #{tpu_custom_call.1} parent=5 // pred_fallthru
      _
  $region6: #{tpu_custom_call.1} parent=0 // loop_footer
    %s14 = sadd.s32 1, %s10
  $region7: #{tpu_custom_call.1} parent=0 // loop_footer_branch
    %9 = sbr.rel target = $region3
  $region8: #{tpu_custom_call.1} parent=0 // loop_exit
    _

</llo_original>
